<compile_context>
chip_gen: v7x
topology: tpu7x:2x2x1
jax: 0.10.0
libtpu: 0.0.40
codegen_flags: <defaults>
</compile_context>

<pallas_src>
import jax
import jax.numpy as jnp
from jax.experimental import pallas as pl
from jax.experimental.pallas import tpu as pltpu

CIN = 3
COUT = 3
KH = 3
KW = 3


def conv2d_nchw_kernel(w_ref, x_ref, o_ref):
    """One batch element of a valid 3x3 conv, NCHW layout, pure VPU.

    w_ref: SMEM (COUT*CIN*KH*KW,) f32, flat weights in OIHW order.
    x_ref: VMEM (1, CIN, H, W) f32.
    o_ref: VMEM (1, COUT, OH, OW) f32.
    """
    _, _, OH, OW = o_ref.shape

    # One f32 accumulator per output channel, kept as (OH, OW) vreg tiles.
    accs = [jnp.zeros((OH, OW), jnp.float32) for _ in range(COUT)]

    for ci in range(CIN):
        xc = x_ref[0, ci]                                 # (H, W), loaded once per plane
        for kh in range(KH):
            for kw in range(KW):
                # Static shifted window — no reshape, no matmul.
                patch = xc[kh:kh + OH, kw:kw + OW]        # (OH, OW)
                for co in range(COUT):
                    widx = ((co * CIN + ci) * KH + kh) * KW + kw
                    accs[co] = accs[co] + w_ref[widx] * patch   # scalar-broadcast FMA

    for co in range(COUT):
        o_ref[0, co, :, :] = accs[co].astype(o_ref.dtype)


def conv_model_forward(x_nchw, w_oihw):
    """Equivalent of ConvModel.forward: valid 3x3 conv, stride 1, no bias.

    x_nchw: (B, 3, H, W) float32 (PyTorch layout, used as-is)
    w_oihw: (3, 3, 3, 3) float32 (Cout, Cin, KH, KW), as in torch.nn.Conv2d
    returns: (B, 3, H-2, W-2) float32 (NCHW)
    """
    B, Cin, H, W = x_nchw.shape
    assert Cin == CIN
    OH, OW = H - KH + 1, W - KW + 1

    # Flatten OIHW weights to 1-D for SMEM (avoids 8x128 SMEM padding blowup).
    w_flat = w_oihw.reshape(-1).astype(jnp.float32)       # (81,)

    # Grid over batch only; each program gets one full (CIN, H, W) image.
    # For large H/W this would become (B, row-tiles) with a 2-row halo in the
    # index_map, but at these sizes one image per step is well under VMEM.
    out = pl.pallas_call(
        conv2d_nchw_kernel,
        out_shape=jax.ShapeDtypeStruct((B, COUT, OH, OW), jnp.float32),
        grid=(B,),
        in_specs=[
            pl.BlockSpec(memory_space=pltpu.MemorySpace.SMEM),        # flat weights
            pl.BlockSpec((1, CIN, H, W), lambda b: (b, 0, 0, 0)),     # one image
        ],
        out_specs=pl.BlockSpec((1, COUT, OH, OW), lambda b: (b, 0, 0, 0)),
        compiler_params=pltpu.CompilerParams(
            dimension_semantics=("parallel",)),
    )(w_flat, x_nchw)

    return out


if __name__ == "__main__":
    key = jax.random.PRNGKey(0)
    kx, kw = jax.random.split(key)

    # Small shapes consistent with the module: batch=2, 3 channels, 16x16 spatial.
    x = jax.random.normal(kx, (2, CIN, 16, 16), dtype=jnp.float32)
    # Deterministic weight init mimicking Conv2d default (uniform in +/- 1/sqrt(fan_in)).
    fan_in = CIN * KH * KW
    bound = 1.0 / (fan_in ** 0.5)
    w = jax.random.uniform(kw, (COUT, CIN, KH, KW), dtype=jnp.float32,
                           minval=-bound, maxval=bound)

    out = conv_model_forward(x, w)
    out = jax.block_until_ready(out)

    # Reference check against XLA's conv (NCHW / OIHW, valid padding).
    ref = jax.lax.conv_general_dilated(
        x, w, window_strides=(1, 1), padding="VALID",
        dimension_numbers=("NCHW", "OIHW", "NCHW"))
    assert out.shape == (2, COUT, 14, 14), out.shape
    assert jnp.allclose(out, ref, atol=1e-5, rtol=1e-5), float(jnp.abs(out - ref).max())

    print("KERNEL_OK")
</pallas_src>

<mosaic_0001>
module attributes {stable_mosaic.version = 11 : i64} {
  func.func @conv2d_nchw_kernel(%arg0: i32, %arg1: memref<81xf32, #tpu.memory_space<smem>>, %arg2: memref<1x3x16x16xf32, #tpu.memory_space<vmem>>, %arg3: memref<1x3x14x14xf32, #tpu.memory_space<vmem>>) attributes {dimension_semantics = [#tpu.dimension_semantics<parallel>], iteration_bounds = array<i64: 2>, scalar_prefetch = 0 : i64, scratch_operands = 0 : i64, tpu.core_type = #tpu.core_type<tc>, window_params = [{transform_indices = @transform_0, window_bounds = array<i64: 81>}, {transform_indices = @transform_1, window_bounds = array<i64: 1, 3, 16, 16>}, {transform_indices = @transform_2, window_bounds = array<i64: 1, 3, 14, 14>}]} {
    %cst = arith.constant 0.000000e+00 : f32
    %0 = vector.broadcast %cst : f32 to vector<14x14xf32>
    %cst_0 = arith.constant 0.000000e+00 : f32
    %1 = vector.broadcast %cst_0 : f32 to vector<14x14xf32>
    %cst_1 = arith.constant 0.000000e+00 : f32
    %2 = vector.broadcast %cst_1 : f32 to vector<14x14xf32>
    %c0 = arith.constant 0 : index
    %c0_2 = arith.constant 0 : index
    %c0_3 = arith.constant 0 : index
    %c0_4 = arith.constant 0 : index
    %3 = vector.load %arg2[%c0, %c0_2, %c0_3, %c0_4] : memref<1x3x16x16xf32, #tpu.memory_space<vmem>>, vector<1x1x16x16xf32>
    %4 = vector.shape_cast %3 : vector<1x1x16x16xf32> to vector<16x16xf32>
    %5 = vector.extract_strided_slice %4 {offsets = [0, 0], sizes = [14, 14], strides = [1, 1]} : vector<16x16xf32> to vector<14x14xf32>
    %c0_5 = arith.constant 0 : index
    %6 = memref.load %arg1[%c0_5] : memref<81xf32, #tpu.memory_space<smem>>
    %7 = vector.broadcast %6 : f32 to vector<14x14xf32>
    %8 = arith.mulf %7, %5 : vector<14x14xf32>
    %9 = arith.addf %0, %8 : vector<14x14xf32>
    %c27 = arith.constant 27 : index
    %10 = memref.load %arg1[%c27] : memref<81xf32, #tpu.memory_space<smem>>
    %11 = vector.broadcast %10 : f32 to vector<14x14xf32>
    %12 = arith.mulf %11, %5 : vector<14x14xf32>
    %13 = arith.addf %1, %12 : vector<14x14xf32>
    %c54 = arith.constant 54 : index
    %14 = memref.load %arg1[%c54] : memref<81xf32, #tpu.memory_space<smem>>
    %15 = vector.broadcast %14 : f32 to vector<14x14xf32>
    %16 = arith.mulf %15, %5 : vector<14x14xf32>
    %17 = arith.addf %2, %16 : vector<14x14xf32>
    %18 = vector.extract_strided_slice %4 {offsets = [0, 1], sizes = [14, 14], strides = [1, 1]} : vector<16x16xf32> to vector<14x14xf32>
    %c1 = arith.constant 1 : index
    %19 = memref.load %arg1[%c1] : memref<81xf32, #tpu.memory_space<smem>>
    %20 = vector.broadcast %19 : f32 to vector<14x14xf32>
    %21 = arith.mulf %20, %18 : vector<14x14xf32>
    %22 = arith.addf %9, %21 : vector<14x14xf32>
    %c28 = arith.constant 28 : index
    %23 = memref.load %arg1[%c28] : memref<81xf32, #tpu.memory_space<smem>>
    %24 = vector.broadcast %23 : f32 to vector<14x14xf32>
    %25 = arith.mulf %24, %18 : vector<14x14xf32>
    %26 = arith.addf %13, %25 : vector<14x14xf32>
    %c55 = arith.constant 55 : index
    %27 = memref.load %arg1[%c55] : memref<81xf32, #tpu.memory_space<smem>>
    %28 = vector.broadcast %27 : f32 to vector<14x14xf32>
    %29 = arith.mulf %28, %18 : vector<14x14xf32>
    %30 = arith.addf %17, %29 : vector<14x14xf32>
    %31 = vector.extract_strided_slice %4 {offsets = [0, 2], sizes = [14, 14], strides = [1, 1]} : vector<16x16xf32> to vector<14x14xf32>
    %c2 = arith.constant 2 : index
    %32 = memref.load %arg1[%c2] : memref<81xf32, #tpu.memory_space<smem>>
    %33 = vector.broadcast %32 : f32 to vector<14x14xf32>
    %34 = arith.mulf %33, %31 : vector<14x14xf32>
    %35 = arith.addf %22, %34 : vector<14x14xf32>
    %c29 = arith.constant 29 : index
    %36 = memref.load %arg1[%c29] : memref<81xf32, #tpu.memory_space<smem>>
    %37 = vector.broadcast %36 : f32 to vector<14x14xf32>
    %38 = arith.mulf %37, %31 : vector<14x14xf32>
    %39 = arith.addf %26, %38 : vector<14x14xf32>
    %c56 = arith.constant 56 : index
    %40 = memref.load %arg1[%c56] : memref<81xf32, #tpu.memory_space<smem>>
    %41 = vector.broadcast %40 : f32 to vector<14x14xf32>
    %42 = arith.mulf %41, %31 : vector<14x14xf32>
    %43 = arith.addf %30, %42 : vector<14x14xf32>
    %44 = vector.extract_strided_slice %4 {offsets = [1, 0], sizes = [14, 14], strides = [1, 1]} : vector<16x16xf32> to vector<14x14xf32>
    %c3 = arith.constant 3 : index
    %45 = memref.load %arg1[%c3] : memref<81xf32, #tpu.memory_space<smem>>
    %46 = vector.broadcast %45 : f32 to vector<14x14xf32>
    %47 = arith.mulf %46, %44 : vector<14x14xf32>
    %48 = arith.addf %35, %47 : vector<14x14xf32>
    %c30 = arith.constant 30 : index
    %49 = memref.load %arg1[%c30] : memref<81xf32, #tpu.memory_space<smem>>
    %50 = vector.broadcast %49 : f32 to vector<14x14xf32>
    %51 = arith.mulf %50, %44 : vector<14x14xf32>
    %52 = arith.addf %39, %51 : vector<14x14xf32>
    %c57 = arith.constant 57 : index
    %53 = memref.load %arg1[%c57] : memref<81xf32, #tpu.memory_space<smem>>
    %54 = vector.broadcast %53 : f32 to vector<14x14xf32>
    %55 = arith.mulf %54, %44 : vector<14x14xf32>
    %56 = arith.addf %43, %55 : vector<14x14xf32>
    %57 = vector.extract_strided_slice %4 {offsets = [1, 1], sizes = [14, 14], strides = [1, 1]} : vector<16x16xf32> to vector<14x14xf32>
    %c4 = arith.constant 4 : index
    %58 = memref.load %arg1[%c4] : memref<81xf32, #tpu.memory_space<smem>>
    %59 = vector.broadcast %58 : f32 to vector<14x14xf32>
    %60 = arith.mulf %59, %57 : vector<14x14xf32>
    %61 = arith.addf %48, %60 : vector<14x14xf32>
    %c31 = arith.constant 31 : index
    %62 = memref.load %arg1[%c31] : memref<81xf32, #tpu.memory_space<smem>>
    %63 = vector.broadcast %62 : f32 to vector<14x14xf32>
    %64 = arith.mulf %63, %57 : vector<14x14xf32>
    %65 = arith.addf %52, %64 : vector<14x14xf32>
    %c58 = arith.constant 58 : index
    %66 = memref.load %arg1[%c58] : memref<81xf32, #tpu.memory_space<smem>>
    %67 = vector.broadcast %66 : f32 to vector<14x14xf32>
    %68 = arith.mulf %67, %57 : vector<14x14xf32>
    %69 = arith.addf %56, %68 : vector<14x14xf32>
    %70 = vector.extract_strided_slice %4 {offsets = [1, 2], sizes = [14, 14], strides = [1, 1]} : vector<16x16xf32> to vector<14x14xf32>
    %c5 = arith.constant 5 : index
    %71 = memref.load %arg1[%c5] : memref<81xf32, #tpu.memory_space<smem>>
    %72 = vector.broadcast %71 : f32 to vector<14x14xf32>
    %73 = arith.mulf %72, %70 : vector<14x14xf32>
    %74 = arith.addf %61, %73 : vector<14x14xf32>
    %c32 = arith.constant 32 : index
    %75 = memref.load %arg1[%c32] : memref<81xf32, #tpu.memory_space<smem>>
    %76 = vector.broadcast %75 : f32 to vector<14x14xf32>
    %77 = arith.mulf %76, %70 : vector<14x14xf32>
    %78 = arith.addf %65, %77 : vector<14x14xf32>
    %c59 = arith.constant 59 : index
    %79 = memref.load %arg1[%c59] : memref<81xf32, #tpu.memory_space<smem>>
    %80 = vector.broadcast %79 : f32 to vector<14x14xf32>
    %81 = arith.mulf %80, %70 : vector<14x14xf32>
    %82 = arith.addf %69, %81 : vector<14x14xf32>
    %83 = vector.extract_strided_slice %4 {offsets = [2, 0], sizes = [14, 14], strides = [1, 1]} : vector<16x16xf32> to vector<14x14xf32>
    %c6 = arith.constant 6 : index
    %84 = memref.load %arg1[%c6] : memref<81xf32, #tpu.memory_space<smem>>
    %85 = vector.broadcast %84 : f32 to vector<14x14xf32>
    %86 = arith.mulf %85, %83 : vector<14x14xf32>
    %87 = arith.addf %74, %86 : vector<14x14xf32>
    %c33 = arith.constant 33 : index
    %88 = memref.load %arg1[%c33] : memref<81xf32, #tpu.memory_space<smem>>
    %89 = vector.broadcast %88 : f32 to vector<14x14xf32>
    %90 = arith.mulf %89, %83 : vector<14x14xf32>
    %91 = arith.addf %78, %90 : vector<14x14xf32>
    %c60 = arith.constant 60 : index
    %92 = memref.load %arg1[%c60] : memref<81xf32, #tpu.memory_space<smem>>
    %93 = vector.broadcast %92 : f32 to vector<14x14xf32>
    %94 = arith.mulf %93, %83 : vector<14x14xf32>
    %95 = arith.addf %82, %94 : vector<14x14xf32>
    %96 = vector.extract_strided_slice %4 {offsets = [2, 1], sizes = [14, 14], strides = [1, 1]} : vector<16x16xf32> to vector<14x14xf32>
    %c7 = arith.constant 7 : index
    %97 = memref.load %arg1[%c7] : memref<81xf32, #tpu.memory_space<smem>>
    %98 = vector.broadcast %97 : f32 to vector<14x14xf32>
    %99 = arith.mulf %98, %96 : vector<14x14xf32>
    %100 = arith.addf %87, %99 : vector<14x14xf32>
    %c34 = arith.constant 34 : index
    %101 = memref.load %arg1[%c34] : memref<81xf32, #tpu.memory_space<smem>>
    %102 = vector.broadcast %101 : f32 to vector<14x14xf32>
    %103 = arith.mulf %102, %96 : vector<14x14xf32>
    %104 = arith.addf %91, %103 : vector<14x14xf32>
    %c61 = arith.constant 61 : index
    %105 = memref.load %arg1[%c61] : memref<81xf32, #tpu.memory_space<smem>>
    %106 = vector.broadcast %105 : f32 to vector<14x14xf32>
    %107 = arith.mulf %106, %96 : vector<14x14xf32>
    %108 = arith.addf %95, %107 : vector<14x14xf32>
    %109 = vector.extract_strided_slice %4 {offsets = [2, 2], sizes = [14, 14], strides = [1, 1]} : vector<16x16xf32> to vector<14x14xf32>
    %c8 = arith.constant 8 : index
    %110 = memref.load %arg1[%c8] : memref<81xf32, #tpu.memory_space<smem>>
    %111 = vector.broadcast %110 : f32 to vector<14x14xf32>
    %112 = arith.mulf %111, %109 : vector<14x14xf32>
    %113 = arith.addf %100, %112 : vector<14x14xf32>
    %c35 = arith.constant 35 : index
    %114 = memref.load %arg1[%c35] : memref<81xf32, #tpu.memory_space<smem>>
    %115 = vector.broadcast %114 : f32 to vector<14x14xf32>
    %116 = arith.mulf %115, %109 : vector<14x14xf32>
    %117 = arith.addf %104, %116 : vector<14x14xf32>
    %c62 = arith.constant 62 : index
    %118 = memref.load %arg1[%c62] : memref<81xf32, #tpu.memory_space<smem>>
    %119 = vector.broadcast %118 : f32 to vector<14x14xf32>
    %120 = arith.mulf %119, %109 : vector<14x14xf32>
    %121 = arith.addf %108, %120 : vector<14x14xf32>
    %c0_6 = arith.constant 0 : index
    %c1_7 = arith.constant 1 : index
    %c0_8 = arith.constant 0 : index
    %c0_9 = arith.constant 0 : index
    %122 = vector.load %arg2[%c0_6, %c1_7, %c0_8, %c0_9] : memref<1x3x16x16xf32, #tpu.memory_space<vmem>>, vector<1x1x16x16xf32>
    %123 = vector.shape_cast %122 : vector<1x1x16x16xf32> to vector<16x16xf32>
    %124 = vector.extract_strided_slice %123 {offsets = [0, 0], sizes = [14, 14], strides = [1, 1]} : vector<16x16xf32> to vector<14x14xf32>
    %c9 = arith.constant 9 : index
    %125 = memref.load %arg1[%c9] : memref<81xf32, #tpu.memory_space<smem>>
    %126 = vector.broadcast %125 : f32 to vector<14x14xf32>
    %127 = arith.mulf %126, %124 : vector<14x14xf32>
    %128 = arith.addf %113, %127 : vector<14x14xf32>
    %c36 = arith.constant 36 : index
    %129 = memref.load %arg1[%c36] : memref<81xf32, #tpu.memory_space<smem>>
    %130 = vector.broadcast %129 : f32 to vector<14x14xf32>
    %131 = arith.mulf %130, %124 : vector<14x14xf32>
    %132 = arith.addf %117, %131 : vector<14x14xf32>
    %c63 = arith.constant 63 : index
    %133 = memref.load %arg1[%c63] : memref<81xf32, #tpu.memory_space<smem>>
    %134 = vector.broadcast %133 : f32 to vector<14x14xf32>
    %135 = arith.mulf %134, %124 : vector<14x14xf32>
    %136 = arith.addf %121, %135 : vector<14x14xf32>
    %137 = vector.extract_strided_slice %123 {offsets = [0, 1], sizes = [14, 14], strides = [1, 1]} : vector<16x16xf32> to vector<14x14xf32>
    %c10 = arith.constant 10 : index
    %138 = memref.load %arg1[%c10] : memref<81xf32, #tpu.memory_space<smem>>
    %139 = vector.broadcast %138 : f32 to vector<14x14xf32>
    %140 = arith.mulf %139, %137 : vector<14x14xf32>
    %141 = arith.addf %128, %140 : vector<14x14xf32>
    %c37 = arith.constant 37 : index
    %142 = memref.load %arg1[%c37] : memref<81xf32, #tpu.memory_space<smem>>
    %143 = vector.broadcast %142 : f32 to vector<14x14xf32>
    %144 = arith.mulf %143, %137 : vector<14x14xf32>
    %145 = arith.addf %132, %144 : vector<14x14xf32>
    %c64 = arith.constant 64 : index
    %146 = memref.load %arg1[%c64] : memref<81xf32, #tpu.memory_space<smem>>
    %147 = vector.broadcast %146 : f32 to vector<14x14xf32>
    %148 = arith.mulf %147, %137 : vector<14x14xf32>
    %149 = arith.addf %136, %148 : vector<14x14xf32>
    %150 = vector.extract_strided_slice %123 {offsets = [0, 2], sizes = [14, 14], strides = [1, 1]} : vector<16x16xf32> to vector<14x14xf32>
    %c11 = arith.constant 11 : index
    %151 = memref.load %arg1[%c11] : memref<81xf32, #tpu.memory_space<smem>>
    %152 = vector.broadcast %151 : f32 to vector<14x14xf32>
    %153 = arith.mulf %152, %150 : vector<14x14xf32>
    %154 = arith.addf %141, %153 : vector<14x14xf32>
    %c38 = arith.constant 38 : index
    %155 = memref.load %arg1[%c38] : memref<81xf32, #tpu.memory_space<smem>>
    %156 = vector.broadcast %155 : f32 to vector<14x14xf32>
    %157 = arith.mulf %156, %150 : vector<14x14xf32>
    %158 = arith.addf %145, %157 : vector<14x14xf32>
    %c65 = arith.constant 65 : index
    %159 = memref.load %arg1[%c65] : memref<81xf32, #tpu.memory_space<smem>>
    %160 = vector.broadcast %159 : f32 to vector<14x14xf32>
    %161 = arith.mulf %160, %150 : vector<14x14xf32>
    %162 = arith.addf %149, %161 : vector<14x14xf32>
    %163 = vector.extract_strided_slice %123 {offsets = [1, 0], sizes = [14, 14], strides = [1, 1]} : vector<16x16xf32> to vector<14x14xf32>
    %c12 = arith.constant 12 : index
    %164 = memref.load %arg1[%c12] : memref<81xf32, #tpu.memory_space<smem>>
    %165 = vector.broadcast %164 : f32 to vector<14x14xf32>
    %166 = arith.mulf %165, %163 : vector<14x14xf32>
    %167 = arith.addf %154, %166 : vector<14x14xf32>
    %c39 = arith.constant 39 : index
    %168 = memref.load %arg1[%c39] : memref<81xf32, #tpu.memory_space<smem>>
    %169 = vector.broadcast %168 : f32 to vector<14x14xf32>
    %170 = arith.mulf %169, %163 : vector<14x14xf32>
    %171 = arith.addf %158, %170 : vector<14x14xf32>
    %c66 = arith.constant 66 : index
    %172 = memref.load %arg1[%c66] : memref<81xf32, #tpu.memory_space<smem>>
    %173 = vector.broadcast %172 : f32 to vector<14x14xf32>
    %174 = arith.mulf %173, %163 : vector<14x14xf32>
    %175 = arith.addf %162, %174 : vector<14x14xf32>
    %176 = vector.extract_strided_slice %123 {offsets = [1, 1], sizes = [14, 14], strides = [1, 1]} : vector<16x16xf32> to vector<14x14xf32>
    %c13 = arith.constant 13 : index
    %177 = memref.load %arg1[%c13] : memref<81xf32, #tpu.memory_space<smem>>
    %178 = vector.broadcast %177 : f32 to vector<14x14xf32>
    %179 = arith.mulf %178, %176 : vector<14x14xf32>
    %180 = arith.addf %167, %179 : vector<14x14xf32>
    %c40 = arith.constant 40 : index
    %181 = memref.load %arg1[%c40] : memref<81xf32, #tpu.memory_space<smem>>
    %182 = vector.broadcast %181 : f32 to vector<14x14xf32>
    %183 = arith.mulf %182, %176 : vector<14x14xf32>
    %184 = arith.addf %171, %183 : vector<14x14xf32>
    %c67 = arith.constant 67 : index
    %185 = memref.load %arg1[%c67] : memref<81xf32, #tpu.memory_space<smem>>
    %186 = vector.broadcast %185 : f32 to vector<14x14xf32>
    %187 = arith.mulf %186, %176 : vector<14x14xf32>
    %188 = arith.addf %175, %187 : vector<14x14xf32>
    %189 = vector.extract_strided_slice %123 {offsets = [1, 2], sizes = [14, 14], strides = [1, 1]} : vector<16x16xf32> to vector<14x14xf32>
    %c14 = arith.constant 14 : index
    %190 = memref.load %arg1[%c14] : memref<81xf32, #tpu.memory_space<smem>>
    %191 = vector.broadcast %190 : f32 to vector<14x14xf32>
    %192 = arith.mulf %191, %189 : vector<14x14xf32>
    %193 = arith.addf %180, %192 : vector<14x14xf32>
    %c41 = arith.constant 41 : index
    %194 = memref.load %arg1[%c41] : memref<81xf32, #tpu.memory_space<smem>>
    %195 = vector.broadcast %194 : f32 to vector<14x14xf32>
    %196 = arith.mulf %195, %189 : vector<14x14xf32>
    %197 = arith.addf %184, %196 : vector<14x14xf32>
    %c68 = arith.constant 68 : index
    %198 = memref.load %arg1[%c68] : memref<81xf32, #tpu.memory_space<smem>>
    %199 = vector.broadcast %198 : f32 to vector<14x14xf32>
    %200 = arith.mulf %199, %189 : vector<14x14xf32>
    %201 = arith.addf %188, %200 : vector<14x14xf32>
    %202 = vector.extract_strided_slice %123 {offsets = [2, 0], sizes = [14, 14], strides = [1, 1]} : vector<16x16xf32> to vector<14x14xf32>
    %c15 = arith.constant 15 : index
    %203 = memref.load %arg1[%c15] : memref<81xf32, #tpu.memory_space<smem>>
    %204 = vector.broadcast %203 : f32 to vector<14x14xf32>
    %205 = arith.mulf %204, %202 : vector<14x14xf32>
    %206 = arith.addf %193, %205 : vector<14x14xf32>
    %c42 = arith.constant 42 : index
    %207 = memref.load %arg1[%c42] : memref<81xf32, #tpu.memory_space<smem>>
    %208 = vector.broadcast %207 : f32 to vector<14x14xf32>
    %209 = arith.mulf %208, %202 : vector<14x14xf32>
    %210 = arith.addf %197, %209 : vector<14x14xf32>
    %c69 = arith.constant 69 : index
    %211 = memref.load %arg1[%c69] : memref<81xf32, #tpu.memory_space<smem>>
    %212 = vector.broadcast %211 : f32 to vector<14x14xf32>
    %213 = arith.mulf %212, %202 : vector<14x14xf32>
    %214 = arith.addf %201, %213 : vector<14x14xf32>
    %215 = vector.extract_strided_slice %123 {offsets = [2, 1], sizes = [14, 14], strides = [1, 1]} : vector<16x16xf32> to vector<14x14xf32>
    %c16 = arith.constant 16 : index
    %216 = memref.load %arg1[%c16] : memref<81xf32, #tpu.memory_space<smem>>
    %217 = vector.broadcast %216 : f32 to vector<14x14xf32>
    %218 = arith.mulf %217, %215 : vector<14x14xf32>
    %219 = arith.addf %206, %218 : vector<14x14xf32>
    %c43 = arith.constant 43 : index
    %220 = memref.load %arg1[%c43] : memref<81xf32, #tpu.memory_space<smem>>
    %221 = vector.broadcast %220 : f32 to vector<14x14xf32>
    %222 = arith.mulf %221, %215 : vector<14x14xf32>
    %223 = arith.addf %210, %222 : vector<14x14xf32>
    %c70 = arith.constant 70 : index
    %224 = memref.load %arg1[%c70] : memref<81xf32, #tpu.memory_space<smem>>
    %225 = vector.broadcast %224 : f32 to vector<14x14xf32>
    %226 = arith.mulf %225, %215 : vector<14x14xf32>
    %227 = arith.addf %214, %226 : vector<14x14xf32>
    %228 = vector.extract_strided_slice %123 {offsets = [2, 2], sizes = [14, 14], strides = [1, 1]} : vector<16x16xf32> to vector<14x14xf32>
    %c17 = arith.constant 17 : index
    %229 = memref.load %arg1[%c17] : memref<81xf32, #tpu.memory_space<smem>>
    %230 = vector.broadcast %229 : f32 to vector<14x14xf32>
    %231 = arith.mulf %230, %228 : vector<14x14xf32>
    %232 = arith.addf %219, %231 : vector<14x14xf32>
    %c44 = arith.constant 44 : index
    %233 = memref.load %arg1[%c44] : memref<81xf32, #tpu.memory_space<smem>>
    %234 = vector.broadcast %233 : f32 to vector<14x14xf32>
    %235 = arith.mulf %234, %228 : vector<14x14xf32>
    %236 = arith.addf %223, %235 : vector<14x14xf32>
    %c71 = arith.constant 71 : index
    %237 = memref.load %arg1[%c71] : memref<81xf32, #tpu.memory_space<smem>>
    %238 = vector.broadcast %237 : f32 to vector<14x14xf32>
    %239 = arith.mulf %238, %228 : vector<14x14xf32>
    %240 = arith.addf %227, %239 : vector<14x14xf32>
    %c0_10 = arith.constant 0 : index
    %c2_11 = arith.constant 2 : index
    %c0_12 = arith.constant 0 : index
    %c0_13 = arith.constant 0 : index
    %241 = vector.load %arg2[%c0_10, %c2_11, %c0_12, %c0_13] : memref<1x3x16x16xf32, #tpu.memory_space<vmem>>, vector<1x1x16x16xf32>
    %242 = vector.shape_cast %241 : vector<1x1x16x16xf32> to vector<16x16xf32>
    %243 = vector.extract_strided_slice %242 {offsets = [0, 0], sizes = [14, 14], strides = [1, 1]} : vector<16x16xf32> to vector<14x14xf32>
    %c18 = arith.constant 18 : index
    %244 = memref.load %arg1[%c18] : memref<81xf32, #tpu.memory_space<smem>>
    %245 = vector.broadcast %244 : f32 to vector<14x14xf32>
    %246 = arith.mulf %245, %243 : vector<14x14xf32>
    %247 = arith.addf %232, %246 : vector<14x14xf32>
    %c45 = arith.constant 45 : index
    %248 = memref.load %arg1[%c45] : memref<81xf32, #tpu.memory_space<smem>>
    %249 = vector.broadcast %248 : f32 to vector<14x14xf32>
    %250 = arith.mulf %249, %243 : vector<14x14xf32>
    %251 = arith.addf %236, %250 : vector<14x14xf32>
    %c72 = arith.constant 72 : index
    %252 = memref.load %arg1[%c72] : memref<81xf32, #tpu.memory_space<smem>>
    %253 = vector.broadcast %252 : f32 to vector<14x14xf32>
    %254 = arith.mulf %253, %243 : vector<14x14xf32>
    %255 = arith.addf %240, %254 : vector<14x14xf32>
    %256 = vector.extract_strided_slice %242 {offsets = [0, 1], sizes = [14, 14], strides = [1, 1]} : vector<16x16xf32> to vector<14x14xf32>
    %c19 = arith.constant 19 : index
    %257 = memref.load %arg1[%c19] : memref<81xf32, #tpu.memory_space<smem>>
    %258 = vector.broadcast %257 : f32 to vector<14x14xf32>
    %259 = arith.mulf %258, %256 : vector<14x14xf32>
    %260 = arith.addf %247, %259 : vector<14x14xf32>
    %c46 = arith.constant 46 : index
    %261 = memref.load %arg1[%c46] : memref<81xf32, #tpu.memory_space<smem>>
    %262 = vector.broadcast %261 : f32 to vector<14x14xf32>
    %263 = arith.mulf %262, %256 : vector<14x14xf32>
    %264 = arith.addf %251, %263 : vector<14x14xf32>
    %c73 = arith.constant 73 : index
    %265 = memref.load %arg1[%c73] : memref<81xf32, #tpu.memory_space<smem>>
    %266 = vector.broadcast %265 : f32 to vector<14x14xf32>
    %267 = arith.mulf %266, %256 : vector<14x14xf32>
    %268 = arith.addf %255, %267 : vector<14x14xf32>
    %269 = vector.extract_strided_slice %242 {offsets = [0, 2], sizes = [14, 14], strides = [1, 1]} : vector<16x16xf32> to vector<14x14xf32>
    %c20 = arith.constant 20 : index
    %270 = memref.load %arg1[%c20] : memref<81xf32, #tpu.memory_space<smem>>
    %271 = vector.broadcast %270 : f32 to vector<14x14xf32>
    %272 = arith.mulf %271, %269 : vector<14x14xf32>
    %273 = arith.addf %260, %272 : vector<14x14xf32>
    %c47 = arith.constant 47 : index
    %274 = memref.load %arg1[%c47] : memref<81xf32, #tpu.memory_space<smem>>
    %275 = vector.broadcast %274 : f32 to vector<14x14xf32>
    %276 = arith.mulf %275, %269 : vector<14x14xf32>
    %277 = arith.addf %264, %276 : vector<14x14xf32>
    %c74 = arith.constant 74 : index
    %278 = memref.load %arg1[%c74] : memref<81xf32, #tpu.memory_space<smem>>
    %279 = vector.broadcast %278 : f32 to vector<14x14xf32>
    %280 = arith.mulf %279, %269 : vector<14x14xf32>
    %281 = arith.addf %268, %280 : vector<14x14xf32>
    %282 = vector.extract_strided_slice %242 {offsets = [1, 0], sizes = [14, 14], strides = [1, 1]} : vector<16x16xf32> to vector<14x14xf32>
    %c21 = arith.constant 21 : index
    %283 = memref.load %arg1[%c21] : memref<81xf32, #tpu.memory_space<smem>>
    %284 = vector.broadcast %283 : f32 to vector<14x14xf32>
    %285 = arith.mulf %284, %282 : vector<14x14xf32>
    %286 = arith.addf %273, %285 : vector<14x14xf32>
    %c48 = arith.constant 48 : index
    %287 = memref.load %arg1[%c48] : memref<81xf32, #tpu.memory_space<smem>>
    %288 = vector.broadcast %287 : f32 to vector<14x14xf32>
    %289 = arith.mulf %288, %282 : vector<14x14xf32>
    %290 = arith.addf %277, %289 : vector<14x14xf32>
    %c75 = arith.constant 75 : index
    %291 = memref.load %arg1[%c75] : memref<81xf32, #tpu.memory_space<smem>>
    %292 = vector.broadcast %291 : f32 to vector<14x14xf32>
    %293 = arith.mulf %292, %282 : vector<14x14xf32>
    %294 = arith.addf %281, %293 : vector<14x14xf32>
    %295 = vector.extract_strided_slice %242 {offsets = [1, 1], sizes = [14, 14], strides = [1, 1]} : vector<16x16xf32> to vector<14x14xf32>
    %c22 = arith.constant 22 : index
    %296 = memref.load %arg1[%c22] : memref<81xf32, #tpu.memory_space<smem>>
    %297 = vector.broadcast %296 : f32 to vector<14x14xf32>
    %298 = arith.mulf %297, %295 : vector<14x14xf32>
    %299 = arith.addf %286, %298 : vector<14x14xf32>
    %c49 = arith.constant 49 : index
    %300 = memref.load %arg1[%c49] : memref<81xf32, #tpu.memory_space<smem>>
    %301 = vector.broadcast %300 : f32 to vector<14x14xf32>
    %302 = arith.mulf %301, %295 : vector<14x14xf32>
    %303 = arith.addf %290, %302 : vector<14x14xf32>
    %c76 = arith.constant 76 : index
    %304 = memref.load %arg1[%c76] : memref<81xf32, #tpu.memory_space<smem>>
    %305 = vector.broadcast %304 : f32 to vector<14x14xf32>
    %306 = arith.mulf %305, %295 : vector<14x14xf32>
    %307 = arith.addf %294, %306 : vector<14x14xf32>
    %308 = vector.extract_strided_slice %242 {offsets = [1, 2], sizes = [14, 14], strides = [1, 1]} : vector<16x16xf32> to vector<14x14xf32>
    %c23 = arith.constant 23 : index
    %309 = memref.load %arg1[%c23] : memref<81xf32, #tpu.memory_space<smem>>
    %310 = vector.broadcast %309 : f32 to vector<14x14xf32>
    %311 = arith.mulf %310, %308 : vector<14x14xf32>
    %312 = arith.addf %299, %311 : vector<14x14xf32>
    %c50 = arith.constant 50 : index
    %313 = memref.load %arg1[%c50] : memref<81xf32, #tpu.memory_space<smem>>
    %314 = vector.broadcast %313 : f32 to vector<14x14xf32>
    %315 = arith.mulf %314, %308 : vector<14x14xf32>
    %316 = arith.addf %303, %315 : vector<14x14xf32>
    %c77 = arith.constant 77 : index
    %317 = memref.load %arg1[%c77] : memref<81xf32, #tpu.memory_space<smem>>
    %318 = vector.broadcast %317 : f32 to vector<14x14xf32>
    %319 = arith.mulf %318, %308 : vector<14x14xf32>
    %320 = arith.addf %307, %319 : vector<14x14xf32>
    %321 = vector.extract_strided_slice %242 {offsets = [2, 0], sizes = [14, 14], strides = [1, 1]} : vector<16x16xf32> to vector<14x14xf32>
    %c24 = arith.constant 24 : index
    %322 = memref.load %arg1[%c24] : memref<81xf32, #tpu.memory_space<smem>>
    %323 = vector.broadcast %322 : f32 to vector<14x14xf32>
    %324 = arith.mulf %323, %321 : vector<14x14xf32>
    %325 = arith.addf %312, %324 : vector<14x14xf32>
    %c51 = arith.constant 51 : index
    %326 = memref.load %arg1[%c51] : memref<81xf32, #tpu.memory_space<smem>>
    %327 = vector.broadcast %326 : f32 to vector<14x14xf32>
    %328 = arith.mulf %327, %321 : vector<14x14xf32>
    %329 = arith.addf %316, %328 : vector<14x14xf32>
    %c78 = arith.constant 78 : index
    %330 = memref.load %arg1[%c78] : memref<81xf32, #tpu.memory_space<smem>>
    %331 = vector.broadcast %330 : f32 to vector<14x14xf32>
    %332 = arith.mulf %331, %321 : vector<14x14xf32>
    %333 = arith.addf %320, %332 : vector<14x14xf32>
    %334 = vector.extract_strided_slice %242 {offsets = [2, 1], sizes = [14, 14], strides = [1, 1]} : vector<16x16xf32> to vector<14x14xf32>
    %c25 = arith.constant 25 : index
    %335 = memref.load %arg1[%c25] : memref<81xf32, #tpu.memory_space<smem>>
    %336 = vector.broadcast %335 : f32 to vector<14x14xf32>
    %337 = arith.mulf %336, %334 : vector<14x14xf32>
    %338 = arith.addf %325, %337 : vector<14x14xf32>
    %c52 = arith.constant 52 : index
    %339 = memref.load %arg1[%c52] : memref<81xf32, #tpu.memory_space<smem>>
    %340 = vector.broadcast %339 : f32 to vector<14x14xf32>
    %341 = arith.mulf %340, %334 : vector<14x14xf32>
    %342 = arith.addf %329, %341 : vector<14x14xf32>
    %c79 = arith.constant 79 : index
    %343 = memref.load %arg1[%c79] : memref<81xf32, #tpu.memory_space<smem>>
    %344 = vector.broadcast %343 : f32 to vector<14x14xf32>
    %345 = arith.mulf %344, %334 : vector<14x14xf32>
    %346 = arith.addf %333, %345 : vector<14x14xf32>
    %347 = vector.extract_strided_slice %242 {offsets = [2, 2], sizes = [14, 14], strides = [1, 1]} : vector<16x16xf32> to vector<14x14xf32>
    %c26 = arith.constant 26 : index
    %348 = memref.load %arg1[%c26] : memref<81xf32, #tpu.memory_space<smem>>
    %349 = vector.broadcast %348 : f32 to vector<14x14xf32>
    %350 = arith.mulf %349, %347 : vector<14x14xf32>
    %351 = arith.addf %338, %350 : vector<14x14xf32>
    %c53 = arith.constant 53 : index
    %352 = memref.load %arg1[%c53] : memref<81xf32, #tpu.memory_space<smem>>
    %353 = vector.broadcast %352 : f32 to vector<14x14xf32>
    %354 = arith.mulf %353, %347 : vector<14x14xf32>
    %355 = arith.addf %342, %354 : vector<14x14xf32>
    %c80 = arith.constant 80 : index
    %356 = memref.load %arg1[%c80] : memref<81xf32, #tpu.memory_space<smem>>
    %357 = vector.broadcast %356 : f32 to vector<14x14xf32>
    %358 = arith.mulf %357, %347 : vector<14x14xf32>
    %359 = arith.addf %346, %358 : vector<14x14xf32>
    %c0_14 = arith.constant 0 : index
    %c0_15 = arith.constant 0 : index
    %c0_16 = arith.constant 0 : index
    %c0_17 = arith.constant 0 : index
    %360 = vector.load %arg3[%c0_14, %c0_15, %c0_16, %c0_17] : memref<1x3x14x14xf32, #tpu.memory_space<vmem>>, vector<1x1x14x14xf32>
    %361 = vector.shape_cast %360 : vector<1x1x14x14xf32> to vector<14x14xf32>
    %362 = vector.shape_cast %351 : vector<14x14xf32> to vector<1x1x14x14xf32>
    tpu.vector_store %arg3[%c0_14, %c0_15, %c0_16, %c0_17], %362 {strides = array<i32>} : memref<1x3x14x14xf32, #tpu.memory_space<vmem>>, vector<1x1x14x14xf32>,
    %c0_18 = arith.constant 0 : index
    %c1_19 = arith.constant 1 : index
    %c0_20 = arith.constant 0 : index
    %c0_21 = arith.constant 0 : index
    %363 = vector.load %arg3[%c0_18, %c1_19, %c0_20, %c0_21] : memref<1x3x14x14xf32, #tpu.memory_space<vmem>>, vector<1x1x14x14xf32>
    %364 = vector.shape_cast %363 : vector<1x1x14x14xf32> to vector<14x14xf32>
    %365 = vector.shape_cast %355 : vector<14x14xf32> to vector<1x1x14x14xf32>
    tpu.vector_store %arg3[%c0_18, %c1_19, %c0_20, %c0_21], %365 {strides = array<i32>} : memref<1x3x14x14xf32, #tpu.memory_space<vmem>>, vector<1x1x14x14xf32>,
    %c0_22 = arith.constant 0 : index
    %c2_23 = arith.constant 2 : index
    %c0_24 = arith.constant 0 : index
    %c0_25 = arith.constant 0 : index
    %366 = vector.load %arg3[%c0_22, %c2_23, %c0_24, %c0_25] : memref<1x3x14x14xf32, #tpu.memory_space<vmem>>, vector<1x1x14x14xf32>
    %367 = vector.shape_cast %366 : vector<1x1x14x14xf32> to vector<14x14xf32>
    %368 = vector.shape_cast %359 : vector<14x14xf32> to vector<1x1x14x14xf32>
    tpu.vector_store %arg3[%c0_22, %c2_23, %c0_24, %c0_25], %368 {strides = array<i32>} : memref<1x3x14x14xf32, #tpu.memory_space<vmem>>, vector<1x1x14x14xf32>,
    return
  }
  func.func @transform_0(%arg0: i32) -> i32 {
    %c0_i32 = arith.constant 0 : i32
    %c0_i32_0 = arith.constant 0 : i32
    return %c0_i32 : i32
  }
  func.func @transform_1(%arg0: i32) -> (i32, i32, i32, i32) {
    %c0_i32 = arith.constant 0 : i32
    %c0_i32_0 = arith.constant 0 : i32
    %c0_i32_1 = arith.constant 0 : i32
    %c0_i32_2 = arith.constant 0 : i32
    return %arg0, %c0_i32, %c0_i32_0, %c0_i32_1 : i32, i32, i32, i32
  }
  func.func @transform_2(%arg0: i32) -> (i32, i32, i32, i32) {
    %c0_i32 = arith.constant 0 : i32
    %c0_i32_0 = arith.constant 0 : i32
    %c0_i32_1 = arith.constant 0 : i32
    %c0_i32_2 = arith.constant 0 : i32
    return %arg0, %c0_i32, %c0_i32_0, %c0_i32_1 : i32, i32, i32, i32
  }
}

</mosaic_0001>

<llo_original>
// kernel: tpu_custom_call.1
$region0: #{tpu_custom_call.1}
  #allocation0 [shape = 'u32[]', space=smem, size = 0x4, offset = 0x4, fixed_abs, tag = 'smem constant byte address 0x4 - core index']
  #allocation1 [shape = 'u32[144,128]{1,0:T(1,128)}', space=vmem, size = 0x12000, scoped, tag = 'internal scratch']
  %s0 = inlined_call_operand.hbm [shape: f32[81], index: 0, kind: input, shape index: {}]
  %s1 = inlined_call_operand.hbm [shape: f32[2,3,16,16], index: 1, kind: input, shape index: {}]
  %s2 = inlined_call_operand.vmem [shape: f32[2,3,14,14], index: 2, kind: output, shape index: {}]
  %s3 = sld [smem:[#allocation0]]
  $region49: #{tpu_custom_call.1} parent=0
    _
  %s5 = ssub.s32 1, %s3
  %s6 = scalar_select 0, %s5, %s3
  $region1: #{tpu_custom_call.1} parent=0
    #allocation2 [shape = 'u8[512]{0}', space=smem, size = 0x200, scoped, tag = 'input window, operand 0, single buffered']
    #allocation3 [shape = 's32[2]{0}', space=sflag, size = 0x8, scoped, tag = 'scoped memory for tpu_custom_call.1']
    #allocation4 [shape = 's32[2]{0}', space=sflag, size = 0x8, scoped, tag = 'scoped memory for tpu_custom_call.1']
    #allocation5 [shape = 'u8[49152]{0}', space=vmem, size = 0xc000, scoped, tag = 'input window, operand 1']
    %7 = vsyncpa [#allocation4], 0
    %8 = vsyncpa [#allocation3], 0
    %s9 = scalar_lea.sflag [#allocation3], 1
    %10 = vsyncpa %s9, 0
    loop: start=0, step=1, limit=4
    $region2: #{tpu_custom_call.1} parent=1 // loop_pre_header
      _
    $region3: #{tpu_custom_call.1} parent=1 // loop_header
      %s12 = sphi 0, %s16
      %p13 = scmp.ge.s32.totalorder %s12, 4
      %s20 = sphi 0, %s20
      %s22 = sphi 0, %s20
      %s23 = sphi 0, %s22
      %s37 = sphi 0, %s23
      %s43 = sphi 0, %s45
      %s46 = sphi 0, %s43
      %s47 = sphi 0, %s46
      %s63 = sphi 0, %s47
      %s69 = sphi 0, %s71
      %s72 = sphi 0, %s69
      %s73 = sphi 0, %s72
      %s89 = sphi 0, %s73
    $region4: #{tpu_custom_call.1} parent=1 // loop_header_branch
      %15 = sbr.rel (%p13) target = $region8
    $region5: #{tpu_custom_call.1} parent=1 // loop_body
      %s17 = ssub.s32 %s12, 1
      %s18 = ssub.s32 %s12, 2
      %s19 = sadd.s32 %s12, 1
      %s21 = sadd.s32 %s20, 1
      %p24 = scmp.eq.s32.totalorder %s12, 1
      %p25 = scmp.ne.s32.totalorder %s20, %s22
      %p26 = scmp.eq.s32.totalorder %s12, 0
      %p27 = por %p25, %p26
      %p28 = scmp.ne.s32.totalorder %s20, %s22
      %p29 = scmp.eq.s32.totalorder %s17, 1
      %p30 = por %p28, %p29
      %p31 = scmp.ne.s32.totalorder %s22, %s23
      %p32 = scmp.eq.s32.totalorder %s17, 0
      %p33 = por %p31, %p32
      %p34 = scmp.ne.s32.totalorder %s22, %s23
      %p35 = scmp.eq.s32.totalorder %s18, 1
      %p36 = por %p34, %p35
      %p38 = scmp.ne.s32.totalorder %s23, %s37
      %p39 = scmp.eq.s32.totalorder %s18, 0
      %p40 = por %p38, %p39
      %s41 = ssub.s32 %s12, %s19
      %p42 = scmp.eq.s32.totalorder %s41, 0
      %s44 = sadd.s32 %s43, 1
      %s45 = scalar_select %p42, %s43, %s44
      %p48 = pneg %p42
      %p49 = scmp.eq.s32.totalorder %s12, 1
      %p50 = por %p48, %p49
      %p51 = scmp.ne.s32.totalorder %s43, %s46
      %p52 = scmp.eq.s32.totalorder %s12, 0
      %p53 = por %p51, %p52
      %p54 = scmp.ne.s32.totalorder %s43, %s46
      %p55 = scmp.eq.s32.totalorder %s17, 1
      %p56 = por %p54, %p55
      %p57 = scmp.ne.s32.totalorder %s46, %s47
      %p58 = scmp.eq.s32.totalorder %s17, 0
      %p59 = por %p57, %p58
      %p60 = scmp.ne.s32.totalorder %s46, %s47
      %p61 = scmp.eq.s32.totalorder %s18, 1
      %p62 = por %p60, %p61
      %p64 = scmp.ne.s32.totalorder %s47, %s63
      %p65 = scmp.eq.s32.totalorder %s18, 0
      %p66 = por %p64, %p65
      %s67 = ssub.s32 %s12, %s19
      %p68 = scmp.eq.s32.totalorder %s67, 0
      %s70 = sadd.s32 %s69, 1
      %s71 = scalar_select %p68, %s69, %s70
      %p74 = pneg %p68
      %p75 = scmp.eq.s32.totalorder %s12, 1
      %p76 = por %p74, %p75
      %p77 = scmp.ne.s32.totalorder %s69, %s72
      %p78 = scmp.eq.s32.totalorder %s12, 0
      %p79 = por %p77, %p78
      %p80 = scmp.ne.s32.totalorder %s69, %s72
      %p81 = scmp.eq.s32.totalorder %s17, 1
      %p82 = por %p80, %p81
      %p83 = scmp.ne.s32.totalorder %s72, %s73
      %p84 = scmp.eq.s32.totalorder %s17, 0
      %p85 = por %p83, %p84
      %p86 = scmp.ne.s32.totalorder %s72, %s73
      %p87 = scmp.eq.s32.totalorder %s18, 1
      %p88 = por %p86, %p87
      %p90 = scmp.ne.s32.totalorder %s73, %s89
      %p91 = scmp.eq.s32.totalorder %s18, 0
      %p92 = por %p90, %p91
      %p93 = scmp.le.s32.totalorder 1, %s12
      %p94 = scmp.lt.s32.totalorder %s12, 3
      %p95 = pnand %p93, %p94
      %p96 = pneg %p95
      // Predicated region
      $region9: #{tpu_custom_call.1} parent=5 // pred_check
        _
      $region10: #{tpu_custom_call.1} parent=5 // pred_check_branch
        %98 = sbr.rel (%p95) target = $region12
      $region11: #{tpu_custom_call.1} parent=5 // pred_region
        %s99 = ssub.s32 %s12, 1
        // Predicated region
        $region13: #{tpu_custom_call.1} parent=11 // pred_check
          %p100 = pneg %p33
        $region14: #{tpu_custom_call.1} parent=11 // pred_check_branch
          %102 = sbr.rel (%p100) target = $region16
        $region15: #{tpu_custom_call.1} parent=11 // pred_region
          %s104 = ssub.s32 16, 16
          %105 = vsyncadd [#allocation4], %s104
          %108 = dma.hbm_to_smem %s0, 16, [#allocation2], [#allocation4]
        $region16: #{tpu_custom_call.1} parent=11 // pred_fallthru
          _
      $region12: #{tpu_custom_call.1} parent=5 // pred_fallthru
        _
      %p109 = scmp.lt.s32.totalorder %s12, 2
      // Predicated region
      $region17: #{tpu_custom_call.1} parent=5 // pred_check
        %p110 = pneg %p109
      $region18: #{tpu_custom_call.1} parent=5 // pred_check_branch
        %112 = sbr.rel (%p110) target = $region20
      $region19: #{tpu_custom_call.1} parent=5 // pred_region
        // Predicated region
        $region21: #{tpu_custom_call.1} parent=19 // pred_check
          %p113 = pneg %p53
        $region22: #{tpu_custom_call.1} parent=19 // pred_check_branch
          %115 = sbr.rel (%p113) target = $region24
        $region23: #{tpu_custom_call.1} parent=19 // pred_region
          %s116 = sand.u32 %s43, 1
          %s117 = scalar_lea.sflag [#allocation3], %s116
          %s118 = sand.u32 %s43, 1
          %s119 = smul.addr %s118, 48
          %s120 = scalar_lea.vmem [#allocation5], %s119
          %s122 = ssub.s32 768, 768
          %123 = vsyncadd %s117, %s122
          %s124 = smul.addr %s12, 6
          %s125 = smul.addr %s124, 128
          %s126 = scalar_lea.hbm %s1, %s125
          %s127 = sshll.u32 %s120, 4
          %s128 = int_to_ptr.vmem [resolvable:$true] %s127
          %133 = dma.hbm_to_vmem [thread:$0]  %s126, 768, %s128, %s117, 128, 128, 8
        $region24: #{tpu_custom_call.1} parent=19 // pred_fallthru
          _
      $region20: #{tpu_custom_call.1} parent=5 // pred_fallthru
        _
      %p134 = scmp.le.s32.totalorder 1, %s12
      %p135 = scmp.lt.s32.totalorder %s12, 3
      %p136 = pnand %p134, %p135
      %p137 = pneg %p136
      // Predicated region
      $region25: #{tpu_custom_call.1} parent=5 // pred_check
        _
      $region26: #{tpu_custom_call.1} parent=5 // pred_check_branch
        %139 = sbr.rel (%p136) target = $region28
      $region27: #{tpu_custom_call.1} parent=5 // pred_region
        %s140 = ssub.s32 %s12, 1
        // Predicated region
        $region29: #{tpu_custom_call.1} parent=27 // pred_check
          %p141 = pneg %p33
        $region30: #{tpu_custom_call.1} parent=27 // pred_check_branch
          %143 = sbr.rel (%p141) target = $region32
        $region31: #{tpu_custom_call.1} parent=27 // pred_region
          %144 = dma.done [#allocation4], 16
        $region32: #{tpu_custom_call.1} parent=27 // pred_fallthru
          _
        %s145 = sand.u32 %s46, 1
        %s146 = scalar_lea.sflag [#allocation3], %s145
        %s147 = sand.u32 %s46, 1
        %s148 = smul.addr %s147, 48
        %s149 = scalar_lea.vmem [#allocation5], %s148
        // Predicated region
        $region33: #{tpu_custom_call.1} parent=27 // pred_check
          %p150 = pneg %p59
        $region34: #{tpu_custom_call.1} parent=27 // pred_check_branch
          %152 = sbr.rel (%p150) target = $region36
        $region35: #{tpu_custom_call.1} parent=27 // pred_region
          %153 = dma.done %s146, 768
        $region36: #{tpu_custom_call.1} parent=27 // pred_fallthru
          _
        %154 = sfence
        %p155 = pneg %p33
        %p156 = pneg %p30
        %s157 = sand.u32 %s46, 1
        %s158 = scalar_lea.sflag [#allocation3], %s157
        %s159 = sand.u32 %s46, 1
        %s160 = smul.addr %s159, 48
        %s161 = scalar_lea.vmem [#allocation5], %s160
        %p162 = pneg %p59
        %p163 = pneg %p56
        %p164 = pneg %p85
        %p165 = pneg %p82
        %p166 = scmp.lt.s32.totalorder %s17, 1
        %s167 = scalar_select %p166, %s17, 1
        %s168 = smul.addr %s167, 6
        %s169 = smul.addr %s168, 8
        %s170 = scalar_lea.vmem %s2, %s169
        %p171 = scmp.lt.s32.totalorder %s17, 1
        %s172 = scalar_select %p171, %s17, 1
        %s173 = smul.addr %s172, 6
        %s174 = smul.addr %s173, 8
        %s175 = scalar_lea.vmem %s2, %s174
        %v176 = vld [vmem:[%s149] sm:$0xff]
        %v177 = vld [vmem:[%s149 + $0x8] sm:$0xff]
        %s178 = sld [smem:[#allocation2]]
        %v179 = vstv %s178
        %v180 = vmul.f32 %v179, %v176
        %v181 = vmul.f32 %v179, %v177
        %v182 = vadd.f32 %v180, 0.0
        %v183 = vadd.f32 %v181, 0.0
        %s184 = sld [smem:[#allocation2 + $0x1b]]
        %v185 = vstv %s184
        %v186 = vmul.f32 %v185, %v176
        %v187 = vmul.f32 %v185, %v177
        %v188 = vadd.f32 %v186, 0.0
        %v189 = vadd.f32 %v187, 0.0
        %s190 = sld [smem:[#allocation2 + $0x36]]
        %v191 = vstv %s190
        %v192 = vmul.f32 %v191, %v176
        %v193 = vmul.f32 %v191, %v177
        %v194 = vadd.f32 %v192, 0.0
        %v195 = vadd.f32 %v193, 0.0
        %s196 = sld [smem:[#allocation2 + $0x1]]
        %v197 = vstv %s196
        %v198 = vmul.f32 %v197, %v176
        %v199 = vmul.f32 %v197, %v177
        %202 = vrot.lane.b32.xlu0 %v198, 127
        %v203 = vpop.permute.xlu0 %202
        %204 = vrot.lane.b32.xlu0 %v199, 127
        %v205 = vpop.permute.xlu0 %204
        %v208 = vadd.f32 %v182, %v203
        %v209 = vadd.f32 %v183, %v205
        %s210 = sld [smem:[#allocation2 + $0x1c]]
        %v211 = vstv %s210
        %v212 = vmul.f32 %v211, %v176
        %v213 = vmul.f32 %v211, %v177
        %216 = vrot.lane.b32.xlu0 %v212, 127
        %v217 = vpop.permute.xlu0 %216
        %218 = vrot.lane.b32.xlu0 %v213, 127
        %v219 = vpop.permute.xlu0 %218
        %v222 = vadd.f32 %v188, %v217
        %v223 = vadd.f32 %v189, %v219
        %s224 = sld [smem:[#allocation2 + $0x37]]
        %v225 = vstv %s224
        %v226 = vmul.f32 %v225, %v176
        %v227 = vmul.f32 %v225, %v177
        %230 = vrot.lane.b32.xlu0 %v226, 127
        %v231 = vpop.permute.xlu0 %230
        %232 = vrot.lane.b32.xlu0 %v227, 127
        %v233 = vpop.permute.xlu0 %232
        %v236 = vadd.f32 %v194, %v231
        %v237 = vadd.f32 %v195, %v233
        %s238 = sld [smem:[#allocation2 + $0x2]]
        %v239 = vstv %s238
        %v240 = vmul.f32 %v239, %v176
        %v241 = vmul.f32 %v239, %v177
        %244 = vrot.lane.b32.xlu0 %v240, 126
        %v245 = vpop.permute.xlu0 %244
        %246 = vrot.lane.b32.xlu0 %v241, 126
        %v247 = vpop.permute.xlu0 %246
        %v250 = vadd.f32 %v208, %v245
        %v251 = vadd.f32 %v209, %v247
        %s252 = sld [smem:[#allocation2 + $0x1d]]
        %v253 = vstv %s252
        %v254 = vmul.f32 %v253, %v176
        %v255 = vmul.f32 %v253, %v177
        %258 = vrot.lane.b32.xlu0 %v254, 126
        %v259 = vpop.permute.xlu0 %258
        %260 = vrot.lane.b32.xlu0 %v255, 126
        %v261 = vpop.permute.xlu0 %260
        %v264 = vadd.f32 %v222, %v259
        %v265 = vadd.f32 %v223, %v261
        %s266 = sld [smem:[#allocation2 + $0x38]]
        %v267 = vstv %s266
        %v268 = vmul.f32 %v267, %v176
        %v269 = vmul.f32 %v267, %v177
        %272 = vrot.lane.b32.xlu0 %v268, 126
        %v273 = vpop.permute.xlu0 %272
        %274 = vrot.lane.b32.xlu0 %v269, 126
        %v275 = vpop.permute.xlu0 %274
        %v278 = vadd.f32 %v236, %v273
        %v279 = vadd.f32 %v237, %v275
        %s280 = sld [smem:[#allocation2 + $0x3]]
        %v281 = vstv %s280
        %v282 = vmul.f32 %v281, %v176
        %v283 = vmul.f32 %v281, %v177
        %vm286 = vcmask 1046528
        %v287 = vrot.slane %v282, 1
        %v288 = vrot.slane %v283, 1
        %v289 = vsel %vm286, %v287, %v288
        %v292 = vadd.f32 %v250, %v289
        %v293 = vadd.f32 %v251, %v288
        %s294 = sld [smem:[#allocation2 + $0x1e]]
        %v295 = vstv %s294
        %v296 = vmul.f32 %v295, %v176
        %v297 = vmul.f32 %v295, %v177
        %v300 = vrot.slane %v296, 1
        %v301 = vrot.slane %v297, 1
        %v302 = vsel %vm286, %v300, %v301
        %v305 = vadd.f32 %v264, %v302
        %v306 = vadd.f32 %v265, %v301
        %s307 = sld [smem:[#allocation2 + $0x39]]
        %v308 = vstv %s307
        %v309 = vmul.f32 %v308, %v176
        %v310 = vmul.f32 %v308, %v177
        %v313 = vrot.slane %v309, 1
        %v314 = vrot.slane %v310, 1
        %v315 = vsel %vm286, %v313, %v314
        %v318 = vadd.f32 %v278, %v315
        %v319 = vadd.f32 %v279, %v314
        %s320 = sld [smem:[#allocation2 + $0x4]]
        %v321 = vstv %s320
        %v322 = vmul.f32 %v321, %v176
        %v323 = vmul.f32 %v321, %v177
        %v326 = vrot.slane %v322, 1
        %v327 = vrot.slane %v323, 1
        %v328 = vsel %vm286, %v326, %v327
        %329 = vrot.lane.b32.xlu0 %v328, 127
        %v330 = vpop.permute.xlu0 %329
        %331 = vrot.lane.b32.xlu0 %v327, 127
        %v332 = vpop.permute.xlu0 %331
        %v335 = vadd.f32 %v292, %v330
        %v336 = vadd.f32 %v293, %v332
        %s337 = sld [smem:[#allocation2 + $0x1f]]
        %v338 = vstv %s337
        %v339 = vmul.f32 %v338, %v176
        %v340 = vmul.f32 %v338, %v177
        %v343 = vrot.slane %v339, 1
        %v344 = vrot.slane %v340, 1
        %v345 = vsel %vm286, %v343, %v344
        %346 = vrot.lane.b32.xlu0 %v345, 127
        %v347 = vpop.permute.xlu0 %346
        %348 = vrot.lane.b32.xlu0 %v344, 127
        %v349 = vpop.permute.xlu0 %348
        %v352 = vadd.f32 %v305, %v347
        %v353 = vadd.f32 %v306, %v349
        %s354 = sld [smem:[#allocation2 + $0x3a]]
        %v355 = vstv %s354
        %v356 = vmul.f32 %v355, %v176
        %v357 = vmul.f32 %v355, %v177
        %v360 = vrot.slane %v356, 1
        %v361 = vrot.slane %v357, 1
        %v362 = vsel %vm286, %v360, %v361
        %363 = vrot.lane.b32.xlu0 %v362, 127
        %v364 = vpop.permute.xlu0 %363
        %365 = vrot.lane.b32.xlu0 %v361, 127
        %v366 = vpop.permute.xlu0 %365
        %v369 = vadd.f32 %v318, %v364
        %v370 = vadd.f32 %v319, %v366
        %s371 = sld [smem:[#allocation2 + $0x5]]
        %v372 = vstv %s371
        %v373 = vmul.f32 %v372, %v176
        %v374 = vmul.f32 %v372, %v177
        %v377 = vrot.slane %v373, 1
        %v378 = vrot.slane %v374, 1
        %v379 = vsel %vm286, %v377, %v378
        %380 = vrot.lane.b32.xlu0 %v379, 126
        %v381 = vpop.permute.xlu0 %380
        %382 = vrot.lane.b32.xlu0 %v378, 126
        %v383 = vpop.permute.xlu0 %382
        %v386 = vadd.f32 %v335, %v381
        %v387 = vadd.f32 %v336, %v383
        %s388 = sld [smem:[#allocation2 + $0x20]]
        %v389 = vstv %s388
        %v390 = vmul.f32 %v389, %v176
        %v391 = vmul.f32 %v389, %v177
        %v394 = vrot.slane %v390, 1
        %v395 = vrot.slane %v391, 1
        %v396 = vsel %vm286, %v394, %v395
        %397 = vrot.lane.b32.xlu0 %v396, 126
        %v398 = vpop.permute.xlu0 %397
        %399 = vrot.lane.b32.xlu0 %v395, 126
        %v400 = vpop.permute.xlu0 %399
        %v403 = vadd.f32 %v352, %v398
        %v404 = vadd.f32 %v353, %v400
        %s405 = sld [smem:[#allocation2 + $0x3b]]
        %v406 = vstv %s405
        %v407 = vmul.f32 %v406, %v176
        %v408 = vmul.f32 %v406, %v177
        %v411 = vrot.slane %v407, 1
        %v412 = vrot.slane %v408, 1
        %v413 = vsel %vm286, %v411, %v412
        %414 = vrot.lane.b32.xlu0 %v413, 126
        %v415 = vpop.permute.xlu0 %414
        %416 = vrot.lane.b32.xlu0 %v412, 126
        %v417 = vpop.permute.xlu0 %416
        %v420 = vadd.f32 %v369, %v415
        %v421 = vadd.f32 %v370, %v417
        %s422 = sld [smem:[#allocation2 + $0x6]]
        %v423 = vstv %s422
        %v424 = vmul.f32 %v423, %v176
        %v425 = vmul.f32 %v423, %v177
        %vm428 = vcmask 1045504
        %v429 = vrot.slane %v424, 2
        %v430 = vrot.slane %v425, 2
        %v431 = vsel %vm428, %v429, %v430
        %v434 = vadd.f32 %v386, %v431
        %v435 = vadd.f32 %v387, %v430
        %s436 = sld [smem:[#allocation2 + $0x21]]
        %v437 = vstv %s436
        %v438 = vmul.f32 %v437, %v176
        %v439 = vmul.f32 %v437, %v177
        %v442 = vrot.slane %v438, 2
        %v443 = vrot.slane %v439, 2
        %v444 = vsel %vm428, %v442, %v443
        %v447 = vadd.f32 %v403, %v444
        %v448 = vadd.f32 %v404, %v443
        %s449 = sld [smem:[#allocation2 + $0x3c]]
        %v450 = vstv %s449
        %v451 = vmul.f32 %v450, %v176
        %v452 = vmul.f32 %v450, %v177
        %v455 = vrot.slane %v451, 2
        %v456 = vrot.slane %v452, 2
        %v457 = vsel %vm428, %v455, %v456
        %v460 = vadd.f32 %v420, %v457
        %v461 = vadd.f32 %v421, %v456
        %s462 = sld [smem:[#allocation2 + $0x7]]
        %v463 = vstv %s462
        %v464 = vmul.f32 %v463, %v176
        %v465 = vmul.f32 %v463, %v177
        %v468 = vrot.slane %v464, 2
        %v469 = vrot.slane %v465, 2
        %v470 = vsel %vm428, %v468, %v469
        %471 = vrot.lane.b32.xlu0 %v470, 127
        %v472 = vpop.permute.xlu0 %471
        %473 = vrot.lane.b32.xlu0 %v469, 127
        %v474 = vpop.permute.xlu0 %473
        %v477 = vadd.f32 %v434, %v472
        %v478 = vadd.f32 %v435, %v474
        %s479 = sld [smem:[#allocation2 + $0x22]]
        %v480 = vstv %s479
        %v481 = vmul.f32 %v480, %v176
        %v482 = vmul.f32 %v480, %v177
        %v485 = vrot.slane %v481, 2
        %v486 = vrot.slane %v482, 2
        %v487 = vsel %vm428, %v485, %v486
        %488 = vrot.lane.b32.xlu0 %v487, 127
        %v489 = vpop.permute.xlu0 %488
        %490 = vrot.lane.b32.xlu0 %v486, 127
        %v491 = vpop.permute.xlu0 %490
        %v494 = vadd.f32 %v447, %v489
        %v495 = vadd.f32 %v448, %v491
        %s496 = sld [smem:[#allocation2 + $0x3d]]
        %v497 = vstv %s496
        %v498 = vmul.f32 %v497, %v176
        %v499 = vmul.f32 %v497, %v177
        %v502 = vrot.slane %v498, 2
        %v503 = vrot.slane %v499, 2
        %v504 = vsel %vm428, %v502, %v503
        %505 = vrot.lane.b32.xlu0 %v504, 127
        %v506 = vpop.permute.xlu0 %505
        %507 = vrot.lane.b32.xlu0 %v503, 127
        %v508 = vpop.permute.xlu0 %507
        %v511 = vadd.f32 %v460, %v506
        %v512 = vadd.f32 %v461, %v508
        %s513 = sld [smem:[#allocation2 + $0x8]]
        %v514 = vstv %s513
        %v515 = vmul.f32 %v514, %v176
        %v516 = vmul.f32 %v514, %v177
        %v519 = vrot.slane %v515, 2
        %v520 = vrot.slane %v516, 2
        %v521 = vsel %vm428, %v519, %v520
        %522 = vrot.lane.b32.xlu0 %v521, 126
        %v523 = vpop.permute.xlu0 %522
        %524 = vrot.lane.b32.xlu0 %v520, 126
        %v525 = vpop.permute.xlu0 %524
        %v528 = vadd.f32 %v477, %v523
        %v529 = vadd.f32 %v478, %v525
        %s530 = sld [smem:[#allocation2 + $0x23]]
        %v531 = vstv %s530
        %v532 = vmul.f32 %v531, %v176
        %v533 = vmul.f32 %v531, %v177
        %v536 = vrot.slane %v532, 2
        %v537 = vrot.slane %v533, 2
        %v538 = vsel %vm428, %v536, %v537
        %539 = vrot.lane.b32.xlu0 %v538, 126
        %v540 = vpop.permute.xlu0 %539
        %541 = vrot.lane.b32.xlu0 %v537, 126
        %v542 = vpop.permute.xlu0 %541
        %v545 = vadd.f32 %v494, %v540
        %v546 = vadd.f32 %v495, %v542
        %s547 = sld [smem:[#allocation2 + $0x3e]]
        %v548 = vstv %s547
        %v549 = vmul.f32 %v548, %v176
        %v550 = vmul.f32 %v548, %v177
        %v553 = vrot.slane %v549, 2
        %v554 = vrot.slane %v550, 2
        %v555 = vsel %vm428, %v553, %v554
        %556 = vrot.lane.b32.xlu0 %v555, 126
        %v557 = vpop.permute.xlu0 %556
        %558 = vrot.lane.b32.xlu0 %v554, 126
        %v559 = vpop.permute.xlu0 %558
        %v562 = vadd.f32 %v511, %v557
        %v563 = vadd.f32 %v512, %v559
        %s564 = scalar_lea.vmem %s149, 16 [#allocation5]
        %v565 = vld [vmem:[%s564] sm:$0xff]
        %v566 = vld [vmem:[%s564 + $0x8] sm:$0xff]
        %s567 = sld [smem:[#allocation2 + $0x9]]
        %v568 = vstv %s567
        %v569 = vmul.f32 %v568, %v565
        %v570 = vmul.f32 %v568, %v566
        %v571 = vadd.f32 %v528, %v569
        %v572 = vadd.f32 %v529, %v570
        %s573 = sld [smem:[#allocation2 + $0x24]]
        %v574 = vstv %s573
        %v575 = vmul.f32 %v574, %v565
        %v576 = vmul.f32 %v574, %v566
        %v577 = vadd.f32 %v545, %v575
        %v578 = vadd.f32 %v546, %v576
        %s579 = sld [smem:[#allocation2 + $0x3f]]
        %v580 = vstv %s579
        %v581 = vmul.f32 %v580, %v565
        %v582 = vmul.f32 %v580, %v566
        %v583 = vadd.f32 %v562, %v581
        %v584 = vadd.f32 %v563, %v582
        %s585 = sld [smem:[#allocation2 + $0xa]]
        %v586 = vstv %s585
        %v587 = vmul.f32 %v586, %v565
        %v588 = vmul.f32 %v586, %v566
        %591 = vrot.lane.b32.xlu0 %v587, 127
        %v592 = vpop.permute.xlu0 %591
        %593 = vrot.lane.b32.xlu0 %v588, 127
        %v594 = vpop.permute.xlu0 %593
        %v597 = vadd.f32 %v571, %v592
        %v598 = vadd.f32 %v572, %v594
        %s599 = sld [smem:[#allocation2 + $0x25]]
        %v600 = vstv %s599
        %v601 = vmul.f32 %v600, %v565
        %v602 = vmul.f32 %v600, %v566
        %605 = vrot.lane.b32.xlu0 %v601, 127
        %v606 = vpop.permute.xlu0 %605
        %607 = vrot.lane.b32.xlu0 %v602, 127
        %v608 = vpop.permute.xlu0 %607
        %v611 = vadd.f32 %v577, %v606
        %v612 = vadd.f32 %v578, %v608
        %s613 = sld [smem:[#allocation2 + $0x40]]
        %v614 = vstv %s613
        %v615 = vmul.f32 %v614, %v565
        %v616 = vmul.f32 %v614, %v566
        %619 = vrot.lane.b32.xlu0 %v615, 127
        %v620 = vpop.permute.xlu0 %619
        %621 = vrot.lane.b32.xlu0 %v616, 127
        %v622 = vpop.permute.xlu0 %621
        %v625 = vadd.f32 %v583, %v620
        %v626 = vadd.f32 %v584, %v622
        %s627 = sld [smem:[#allocation2 + $0xb]]
        %v628 = vstv %s627
        %v629 = vmul.f32 %v628, %v565
        %v630 = vmul.f32 %v628, %v566
        %633 = vrot.lane.b32.xlu0 %v629, 126
        %v634 = vpop.permute.xlu0 %633
        %635 = vrot.lane.b32.xlu0 %v630, 126
        %v636 = vpop.permute.xlu0 %635
        %v639 = vadd.f32 %v597, %v634
        %v640 = vadd.f32 %v598, %v636
        %s641 = sld [smem:[#allocation2 + $0x26]]
        %v642 = vstv %s641
        %v643 = vmul.f32 %v642, %v565
        %v644 = vmul.f32 %v642, %v566
        %647 = vrot.lane.b32.xlu0 %v643, 126
        %v648 = vpop.permute.xlu0 %647
        %649 = vrot.lane.b32.xlu0 %v644, 126
        %v650 = vpop.permute.xlu0 %649
        %v653 = vadd.f32 %v611, %v648
        %v654 = vadd.f32 %v612, %v650
        %s655 = sld [smem:[#allocation2 + $0x41]]
        %v656 = vstv %s655
        %v657 = vmul.f32 %v656, %v565
        %v658 = vmul.f32 %v656, %v566
        %661 = vrot.lane.b32.xlu0 %v657, 126
        %v662 = vpop.permute.xlu0 %661
        %663 = vrot.lane.b32.xlu0 %v658, 126
        %v664 = vpop.permute.xlu0 %663
        %v667 = vadd.f32 %v625, %v662
        %v668 = vadd.f32 %v626, %v664
        %s669 = sld [smem:[#allocation2 + $0xc]]
        %v670 = vstv %s669
        %v671 = vmul.f32 %v670, %v565
        %v672 = vmul.f32 %v670, %v566
        %v675 = vrot.slane %v671, 1
        %v676 = vrot.slane %v672, 1
        %v677 = vsel %vm286, %v675, %v676
        %v680 = vadd.f32 %v639, %v677
        %v681 = vadd.f32 %v640, %v676
        %s682 = sld [smem:[#allocation2 + $0x27]]
        %v683 = vstv %s682
        %v684 = vmul.f32 %v683, %v565
        %v685 = vmul.f32 %v683, %v566
        %v688 = vrot.slane %v684, 1
        %v689 = vrot.slane %v685, 1
        %v690 = vsel %vm286, %v688, %v689
        %v693 = vadd.f32 %v653, %v690
        %v694 = vadd.f32 %v654, %v689
        %s695 = sld [smem:[#allocation2 + $0x42]]
        %v696 = vstv %s695
        %v697 = vmul.f32 %v696, %v565
        %v698 = vmul.f32 %v696, %v566
        %v701 = vrot.slane %v697, 1
        %v702 = vrot.slane %v698, 1
        %v703 = vsel %vm286, %v701, %v702
        %v706 = vadd.f32 %v667, %v703
        %v707 = vadd.f32 %v668, %v702
        %s708 = sld [smem:[#allocation2 + $0xd]]
        %v709 = vstv %s708
        %v710 = vmul.f32 %v709, %v565
        %v711 = vmul.f32 %v709, %v566
        %v714 = vrot.slane %v710, 1
        %v715 = vrot.slane %v711, 1
        %v716 = vsel %vm286, %v714, %v715
        %717 = vrot.lane.b32.xlu0 %v716, 127
        %v718 = vpop.permute.xlu0 %717
        %719 = vrot.lane.b32.xlu0 %v715, 127
        %v720 = vpop.permute.xlu0 %719
        %v723 = vadd.f32 %v680, %v718
        %v724 = vadd.f32 %v681, %v720
        %s725 = sld [smem:[#allocation2 + $0x28]]
        %v726 = vstv %s725
        %v727 = vmul.f32 %v726, %v565
        %v728 = vmul.f32 %v726, %v566
        %v731 = vrot.slane %v727, 1
        %v732 = vrot.slane %v728, 1
        %v733 = vsel %vm286, %v731, %v732
        %734 = vrot.lane.b32.xlu0 %v733, 127
        %v735 = vpop.permute.xlu0 %734
        %736 = vrot.lane.b32.xlu0 %v732, 127
        %v737 = vpop.permute.xlu0 %736
        %v740 = vadd.f32 %v693, %v735
        %v741 = vadd.f32 %v694, %v737
        %s742 = sld [smem:[#allocation2 + $0x43]]
        %v743 = vstv %s742
        %v744 = vmul.f32 %v743, %v565
        %v745 = vmul.f32 %v743, %v566
        %v748 = vrot.slane %v744, 1
        %v749 = vrot.slane %v745, 1
        %v750 = vsel %vm286, %v748, %v749
        %751 = vrot.lane.b32.xlu0 %v750, 127
        %v752 = vpop.permute.xlu0 %751
        %753 = vrot.lane.b32.xlu0 %v749, 127
        %v754 = vpop.permute.xlu0 %753
        %v757 = vadd.f32 %v706, %v752
        %v758 = vadd.f32 %v707, %v754
        %s759 = sld [smem:[#allocation2 + $0xe]]
        %v760 = vstv %s759
        %v761 = vmul.f32 %v760, %v565
        %v762 = vmul.f32 %v760, %v566
        %v765 = vrot.slane %v761, 1
        %v766 = vrot.slane %v762, 1
        %v767 = vsel %vm286, %v765, %v766
        %768 = vrot.lane.b32.xlu0 %v767, 126
        %v769 = vpop.permute.xlu0 %768
        %770 = vrot.lane.b32.xlu0 %v766, 126
        %v771 = vpop.permute.xlu0 %770
        %v774 = vadd.f32 %v723, %v769
        %v775 = vadd.f32 %v724, %v771
        %s776 = sld [smem:[#allocation2 + $0x29]]
        %v777 = vstv %s776
        %v778 = vmul.f32 %v777, %v565
        %v779 = vmul.f32 %v777, %v566
        %v782 = vrot.slane %v778, 1
        %v783 = vrot.slane %v779, 1
        %v784 = vsel %vm286, %v782, %v783
        %785 = vrot.lane.b32.xlu0 %v784, 126
        %v786 = vpop.permute.xlu0 %785
        %787 = vrot.lane.b32.xlu0 %v783, 126
        %v788 = vpop.permute.xlu0 %787
        %v791 = vadd.f32 %v740, %v786
        %v792 = vadd.f32 %v741, %v788
        %s793 = sld [smem:[#allocation2 + $0x44]]
        %v794 = vstv %s793
        %v795 = vmul.f32 %v794, %v565
        %v796 = vmul.f32 %v794, %v566
        %v799 = vrot.slane %v795, 1
        %v800 = vrot.slane %v796, 1
        %v801 = vsel %vm286, %v799, %v800
        %802 = vrot.lane.b32.xlu0 %v801, 126
        %v803 = vpop.permute.xlu0 %802
        %804 = vrot.lane.b32.xlu0 %v800, 126
        %v805 = vpop.permute.xlu0 %804
        %v808 = vadd.f32 %v757, %v803
        %v809 = vadd.f32 %v758, %v805
        %s810 = sld [smem:[#allocation2 + $0xf]]
        %v811 = vstv %s810
        %v812 = vmul.f32 %v811, %v565
        %v813 = vmul.f32 %v811, %v566
        %v816 = vrot.slane %v812, 2
        %v817 = vrot.slane %v813, 2
        %v818 = vsel %vm428, %v816, %v817
        %v821 = vadd.f32 %v774, %v818
        %v822 = vadd.f32 %v775, %v817
        %s823 = sld [smem:[#allocation2 + $0x2a]]
        %v824 = vstv %s823
        %v825 = vmul.f32 %v824, %v565
        %v826 = vmul.f32 %v824, %v566
        %v829 = vrot.slane %v825, 2
        %v830 = vrot.slane %v826, 2
        %v831 = vsel %vm428, %v829, %v830
        %v834 = vadd.f32 %v791, %v831
        %v835 = vadd.f32 %v792, %v830
        %s836 = sld [smem:[#allocation2 + $0x45]]
        %v837 = vstv %s836
        %v838 = vmul.f32 %v837, %v565
        %v839 = vmul.f32 %v837, %v566
        %v842 = vrot.slane %v838, 2
        %v843 = vrot.slane %v839, 2
        %v844 = vsel %vm428, %v842, %v843
        %v847 = vadd.f32 %v808, %v844
        %v848 = vadd.f32 %v809, %v843
        %s849 = sld [smem:[#allocation2 + $0x10]]
        %v850 = vstv %s849
        %v851 = vmul.f32 %v850, %v565
        %v852 = vmul.f32 %v850, %v566
        %v855 = vrot.slane %v851, 2
        %v856 = vrot.slane %v852, 2
        %v857 = vsel %vm428, %v855, %v856
        %858 = vrot.lane.b32.xlu0 %v857, 127
        %v859 = vpop.permute.xlu0 %858
        %860 = vrot.lane.b32.xlu0 %v856, 127
        %v861 = vpop.permute.xlu0 %860
        %v864 = vadd.f32 %v821, %v859
        %v865 = vadd.f32 %v822, %v861
        %s866 = sld [smem:[#allocation2 + $0x2b]]
        %v867 = vstv %s866
        %v868 = vmul.f32 %v867, %v565
        %v869 = vmul.f32 %v867, %v566
        %v872 = vrot.slane %v868, 2
        %v873 = vrot.slane %v869, 2
        %v874 = vsel %vm428, %v872, %v873
        %875 = vrot.lane.b32.xlu0 %v874, 127
        %v876 = vpop.permute.xlu0 %875
        %877 = vrot.lane.b32.xlu0 %v873, 127
        %v878 = vpop.permute.xlu0 %877
        %v881 = vadd.f32 %v834, %v876
        %v882 = vadd.f32 %v835, %v878
        %s883 = sld [smem:[#allocation2 + $0x46]]
        %v884 = vstv %s883
        %v885 = vmul.f32 %v884, %v565
        %v886 = vmul.f32 %v884, %v566
        %v889 = vrot.slane %v885, 2
        %v890 = vrot.slane %v886, 2
        %v891 = vsel %vm428, %v889, %v890
        %892 = vrot.lane.b32.xlu0 %v891, 127
        %v893 = vpop.permute.xlu0 %892
        %894 = vrot.lane.b32.xlu0 %v890, 127
        %v895 = vpop.permute.xlu0 %894
        %v898 = vadd.f32 %v847, %v893
        %v899 = vadd.f32 %v848, %v895
        %s900 = sld [smem:[#allocation2 + $0x11]]
        %v901 = vstv %s900
        %v902 = vmul.f32 %v901, %v565
        %v903 = vmul.f32 %v901, %v566
        %v906 = vrot.slane %v902, 2
        %v907 = vrot.slane %v903, 2
        %v908 = vsel %vm428, %v906, %v907
        %909 = vrot.lane.b32.xlu0 %v908, 126
        %v910 = vpop.permute.xlu0 %909
        %911 = vrot.lane.b32.xlu0 %v907, 126
        %v912 = vpop.permute.xlu0 %911
        %v915 = vadd.f32 %v864, %v910
        %v916 = vadd.f32 %v865, %v912
        %s917 = sld [smem:[#allocation2 + $0x2c]]
        %v918 = vstv %s917
        %v919 = vmul.f32 %v918, %v565
        %v920 = vmul.f32 %v918, %v566
        %v923 = vrot.slane %v919, 2
        %v924 = vrot.slane %v920, 2
        %v925 = vsel %vm428, %v923, %v924
        %926 = vrot.lane.b32.xlu0 %v925, 126
        %v927 = vpop.permute.xlu0 %926
        %928 = vrot.lane.b32.xlu0 %v924, 126
        %v929 = vpop.permute.xlu0 %928
        %v932 = vadd.f32 %v881, %v927
        %v933 = vadd.f32 %v882, %v929
        %s934 = sld [smem:[#allocation2 + $0x47]]
        %v935 = vstv %s934
        %v936 = vmul.f32 %v935, %v565
        %v937 = vmul.f32 %v935, %v566
        %v940 = vrot.slane %v936, 2
        %v941 = vrot.slane %v937, 2
        %v942 = vsel %vm428, %v940, %v941
        %943 = vrot.lane.b32.xlu0 %v942, 126
        %v944 = vpop.permute.xlu0 %943
        %945 = vrot.lane.b32.xlu0 %v941, 126
        %v946 = vpop.permute.xlu0 %945
        %v949 = vadd.f32 %v898, %v944
        %v950 = vadd.f32 %v899, %v946
        %s951 = scalar_lea.vmem %s149, 32 [#allocation5]
        %v952 = vld [vmem:[%s951] sm:$0xff]
        %v953 = vld [vmem:[%s951 + $0x8] sm:$0xff]
        %s954 = sld [smem:[#allocation2 + $0x12]]
        %v955 = vstv %s954
        %v956 = vmul.f32 %v955, %v952
        %v957 = vmul.f32 %v955, %v953
        %v958 = vadd.f32 %v915, %v956
        %v959 = vadd.f32 %v916, %v957
        %s960 = sld [smem:[#allocation2 + $0x2d]]
        %v961 = vstv %s960
        %v962 = vmul.f32 %v961, %v952
        %v963 = vmul.f32 %v961, %v953
        %v964 = vadd.f32 %v932, %v962
        %v965 = vadd.f32 %v933, %v963
        %s966 = sld [smem:[#allocation2 + $0x48]]
        %v967 = vstv %s966
        %v968 = vmul.f32 %v967, %v952
        %v969 = vmul.f32 %v967, %v953
        %v970 = vadd.f32 %v949, %v968
        %v971 = vadd.f32 %v950, %v969
        %s972 = sld [smem:[#allocation2 + $0x13]]
        %v973 = vstv %s972
        %v974 = vmul.f32 %v973, %v952
        %v975 = vmul.f32 %v973, %v953
        %978 = vrot.lane.b32.xlu0 %v974, 127
        %v979 = vpop.permute.xlu0 %978
        %980 = vrot.lane.b32.xlu0 %v975, 127
        %v981 = vpop.permute.xlu0 %980
        %v984 = vadd.f32 %v958, %v979
        %v985 = vadd.f32 %v959, %v981
        %s986 = sld [smem:[#allocation2 + $0x2e]]
        %v987 = vstv %s986
        %v988 = vmul.f32 %v987, %v952
        %v989 = vmul.f32 %v987, %v953
        %992 = vrot.lane.b32.xlu0 %v988, 127
        %v993 = vpop.permute.xlu0 %992
        %994 = vrot.lane.b32.xlu0 %v989, 127
        %v995 = vpop.permute.xlu0 %994
        %v998 = vadd.f32 %v964, %v993
        %v999 = vadd.f32 %v965, %v995
        %s1000 = sld [smem:[#allocation2 + $0x49]]
        %v1001 = vstv %s1000
        %v1002 = vmul.f32 %v1001, %v952
        %v1003 = vmul.f32 %v1001, %v953
        %1006 = vrot.lane.b32.xlu0 %v1002, 127
        %v1007 = vpop.permute.xlu0 %1006
        %1008 = vrot.lane.b32.xlu0 %v1003, 127
        %v1009 = vpop.permute.xlu0 %1008
        %v1012 = vadd.f32 %v970, %v1007
        %v1013 = vadd.f32 %v971, %v1009
        %s1014 = sld [smem:[#allocation2 + $0x14]]
        %v1015 = vstv %s1014
        %v1016 = vmul.f32 %v1015, %v952
        %v1017 = vmul.f32 %v1015, %v953
        %1020 = vrot.lane.b32.xlu0 %v1016, 126
        %v1021 = vpop.permute.xlu0 %1020
        %1022 = vrot.lane.b32.xlu0 %v1017, 126
        %v1023 = vpop.permute.xlu0 %1022
        %v1026 = vadd.f32 %v984, %v1021
        %v1027 = vadd.f32 %v985, %v1023
        %s1028 = sld [smem:[#allocation2 + $0x2f]]
        %v1029 = vstv %s1028
        %v1030 = vmul.f32 %v1029, %v952
        %v1031 = vmul.f32 %v1029, %v953
        %1034 = vrot.lane.b32.xlu0 %v1030, 126
        %v1035 = vpop.permute.xlu0 %1034
        %1036 = vrot.lane.b32.xlu0 %v1031, 126
        %v1037 = vpop.permute.xlu0 %1036
        %v1040 = vadd.f32 %v998, %v1035
        %v1041 = vadd.f32 %v999, %v1037
        %s1042 = sld [smem:[#allocation2 + $0x4a]]
        %v1043 = vstv %s1042
        %v1044 = vmul.f32 %v1043, %v952
        %v1045 = vmul.f32 %v1043, %v953
        %1048 = vrot.lane.b32.xlu0 %v1044, 126
        %v1049 = vpop.permute.xlu0 %1048
        %1050 = vrot.lane.b32.xlu0 %v1045, 126
        %v1051 = vpop.permute.xlu0 %1050
        %v1054 = vadd.f32 %v1012, %v1049
        %v1055 = vadd.f32 %v1013, %v1051
        %s1056 = sld [smem:[#allocation2 + $0x15]]
        %v1057 = vstv %s1056
        %v1058 = vmul.f32 %v1057, %v952
        %v1059 = vmul.f32 %v1057, %v953
        %v1062 = vrot.slane %v1058, 1
        %v1063 = vrot.slane %v1059, 1
        %v1064 = vsel %vm286, %v1062, %v1063
        %v1067 = vadd.f32 %v1026, %v1064
        %v1068 = vadd.f32 %v1027, %v1063
        %s1069 = sld [smem:[#allocation2 + $0x30]]
        %v1070 = vstv %s1069
        %v1071 = vmul.f32 %v1070, %v952
        %v1072 = vmul.f32 %v1070, %v953
        %v1075 = vrot.slane %v1071, 1
        %v1076 = vrot.slane %v1072, 1
        %v1077 = vsel %vm286, %v1075, %v1076
        %v1080 = vadd.f32 %v1040, %v1077
        %v1081 = vadd.f32 %v1041, %v1076
        %s1082 = sld [smem:[#allocation2 + $0x4b]]
        %v1083 = vstv %s1082
        %v1084 = vmul.f32 %v1083, %v952
        %v1085 = vmul.f32 %v1083, %v953
        %v1088 = vrot.slane %v1084, 1
        %v1089 = vrot.slane %v1085, 1
        %v1090 = vsel %vm286, %v1088, %v1089
        %v1093 = vadd.f32 %v1054, %v1090
        %v1094 = vadd.f32 %v1055, %v1089
        %s1095 = sld [smem:[#allocation2 + $0x16]]
        %v1096 = vstv %s1095
        %v1097 = vmul.f32 %v1096, %v952
        %v1098 = vmul.f32 %v1096, %v953
        %v1101 = vrot.slane %v1097, 1
        %v1102 = vrot.slane %v1098, 1
        %v1103 = vsel %vm286, %v1101, %v1102
        %1104 = vrot.lane.b32.xlu0 %v1103, 127
        %v1105 = vpop.permute.xlu0 %1104
        %1106 = vrot.lane.b32.xlu0 %v1102, 127
        %v1107 = vpop.permute.xlu0 %1106
        %v1110 = vadd.f32 %v1067, %v1105
        %v1111 = vadd.f32 %v1068, %v1107
        %s1112 = sld [smem:[#allocation2 + $0x31]]
        %v1113 = vstv %s1112
        %v1114 = vmul.f32 %v1113, %v952
        %v1115 = vmul.f32 %v1113, %v953
        %v1118 = vrot.slane %v1114, 1
        %v1119 = vrot.slane %v1115, 1
        %v1120 = vsel %vm286, %v1118, %v1119
        %1121 = vrot.lane.b32.xlu0 %v1120, 127
        %v1122 = vpop.permute.xlu0 %1121
        %1123 = vrot.lane.b32.xlu0 %v1119, 127
        %v1124 = vpop.permute.xlu0 %1123
        %v1127 = vadd.f32 %v1080, %v1122
        %v1128 = vadd.f32 %v1081, %v1124
        %s1129 = sld [smem:[#allocation2 + $0x4c]]
        %v1130 = vstv %s1129
        %v1131 = vmul.f32 %v1130, %v952
        %v1132 = vmul.f32 %v1130, %v953
        %v1135 = vrot.slane %v1131, 1
        %v1136 = vrot.slane %v1132, 1
        %v1137 = vsel %vm286, %v1135, %v1136
        %1138 = vrot.lane.b32.xlu0 %v1137, 127
        %v1139 = vpop.permute.xlu0 %1138
        %1140 = vrot.lane.b32.xlu0 %v1136, 127
        %v1141 = vpop.permute.xlu0 %1140
        %v1144 = vadd.f32 %v1093, %v1139
        %v1145 = vadd.f32 %v1094, %v1141
        %s1146 = sld [smem:[#allocation2 + $0x17]]
        %v1147 = vstv %s1146
        %v1148 = vmul.f32 %v1147, %v952
        %v1149 = vmul.f32 %v1147, %v953
        %v1152 = vrot.slane %v1148, 1
        %v1153 = vrot.slane %v1149, 1
        %v1154 = vsel %vm286, %v1152, %v1153
        %1155 = vrot.lane.b32.xlu0 %v1154, 126
        %v1156 = vpop.permute.xlu0 %1155
        %1157 = vrot.lane.b32.xlu0 %v1153, 126
        %v1158 = vpop.permute.xlu0 %1157
        %v1161 = vadd.f32 %v1110, %v1156
        %v1162 = vadd.f32 %v1111, %v1158
        %s1163 = sld [smem:[#allocation2 + $0x32]]
        %v1164 = vstv %s1163
        %v1165 = vmul.f32 %v1164, %v952
        %v1166 = vmul.f32 %v1164, %v953
        %v1169 = vrot.slane %v1165, 1
        %v1170 = vrot.slane %v1166, 1
        %v1171 = vsel %vm286, %v1169, %v1170
        %1172 = vrot.lane.b32.xlu0 %v1171, 126
        %v1173 = vpop.permute.xlu0 %1172
        %1174 = vrot.lane.b32.xlu0 %v1170, 126
        %v1175 = vpop.permute.xlu0 %1174
        %v1178 = vadd.f32 %v1127, %v1173
        %v1179 = vadd.f32 %v1128, %v1175
        %s1180 = sld [smem:[#allocation2 + $0x4d]]
        %v1181 = vstv %s1180
        %v1182 = vmul.f32 %v1181, %v952
        %v1183 = vmul.f32 %v1181, %v953
        %v1186 = vrot.slane %v1182, 1
        %v1187 = vrot.slane %v1183, 1
        %v1188 = vsel %vm286, %v1186, %v1187
        %1189 = vrot.lane.b32.xlu0 %v1188, 126
        %v1190 = vpop.permute.xlu0 %1189
        %1191 = vrot.lane.b32.xlu0 %v1187, 126
        %v1192 = vpop.permute.xlu0 %1191
        %v1195 = vadd.f32 %v1144, %v1190
        %v1196 = vadd.f32 %v1145, %v1192
        %s1197 = sld [smem:[#allocation2 + $0x18]]
        %v1198 = vstv %s1197
        %v1199 = vmul.f32 %v1198, %v952
        %v1200 = vmul.f32 %v1198, %v953
        %v1203 = vrot.slane %v1199, 2
        %v1204 = vrot.slane %v1200, 2
        %v1205 = vsel %vm428, %v1203, %v1204
        %v1208 = vadd.f32 %v1161, %v1205
        %v1209 = vadd.f32 %v1162, %v1204
        %s1210 = sld [smem:[#allocation2 + $0x33]]
        %v1211 = vstv %s1210
        %v1212 = vmul.f32 %v1211, %v952
        %v1213 = vmul.f32 %v1211, %v953
        %v1216 = vrot.slane %v1212, 2
        %v1217 = vrot.slane %v1213, 2
        %v1218 = vsel %vm428, %v1216, %v1217
        %v1221 = vadd.f32 %v1178, %v1218
        %v1222 = vadd.f32 %v1179, %v1217
        %s1223 = sld [smem:[#allocation2 + $0x4e]]
        %v1224 = vstv %s1223
        %v1225 = vmul.f32 %v1224, %v952
        %v1226 = vmul.f32 %v1224, %v953
        %v1229 = vrot.slane %v1225, 2
        %v1230 = vrot.slane %v1226, 2
        %v1231 = vsel %vm428, %v1229, %v1230
        %v1234 = vadd.f32 %v1195, %v1231
        %v1235 = vadd.f32 %v1196, %v1230
        %s1236 = sld [smem:[#allocation2 + $0x19]]
        %v1237 = vstv %s1236
        %v1238 = vmul.f32 %v1237, %v952
        %v1239 = vmul.f32 %v1237, %v953
        %v1242 = vrot.slane %v1238, 2
        %v1243 = vrot.slane %v1239, 2
        %v1244 = vsel %vm428, %v1242, %v1243
        %1245 = vrot.lane.b32.xlu0 %v1244, 127
        %v1246 = vpop.permute.xlu0 %1245
        %1247 = vrot.lane.b32.xlu0 %v1243, 127
        %v1248 = vpop.permute.xlu0 %1247
        %v1251 = vadd.f32 %v1208, %v1246
        %v1252 = vadd.f32 %v1209, %v1248
        %s1253 = sld [smem:[#allocation2 + $0x34]]
        %v1254 = vstv %s1253
        %v1255 = vmul.f32 %v1254, %v952
        %v1256 = vmul.f32 %v1254, %v953
        %v1259 = vrot.slane %v1255, 2
        %v1260 = vrot.slane %v1256, 2
        %v1261 = vsel %vm428, %v1259, %v1260
        %1262 = vrot.lane.b32.xlu0 %v1261, 127
        %v1263 = vpop.permute.xlu0 %1262
        %1264 = vrot.lane.b32.xlu0 %v1260, 127
        %v1265 = vpop.permute.xlu0 %1264
        %v1268 = vadd.f32 %v1221, %v1263
        %v1269 = vadd.f32 %v1222, %v1265
        %s1270 = sld [smem:[#allocation2 + $0x4f]]
        %v1271 = vstv %s1270
        %v1272 = vmul.f32 %v1271, %v952
        %v1273 = vmul.f32 %v1271, %v953
        %v1276 = vrot.slane %v1272, 2
        %v1277 = vrot.slane %v1273, 2
        %v1278 = vsel %vm428, %v1276, %v1277
        %1279 = vrot.lane.b32.xlu0 %v1278, 127
        %v1280 = vpop.permute.xlu0 %1279
        %1281 = vrot.lane.b32.xlu0 %v1277, 127
        %v1282 = vpop.permute.xlu0 %1281
        %v1285 = vadd.f32 %v1234, %v1280
        %v1286 = vadd.f32 %v1235, %v1282
        %s1287 = sld [smem:[#allocation2 + $0x1a]]
        %v1288 = vstv %s1287
        %v1289 = vmul.f32 %v1288, %v952
        %v1290 = vmul.f32 %v1288, %v953
        %v1293 = vrot.slane %v1289, 2
        %v1294 = vrot.slane %v1290, 2
        %v1295 = vsel %vm428, %v1293, %v1294
        %1296 = vrot.lane.b32.xlu0 %v1295, 126
        %v1297 = vpop.permute.xlu0 %1296
        %1298 = vrot.lane.b32.xlu0 %v1294, 126
        %v1299 = vpop.permute.xlu0 %1298
        %v1302 = vadd.f32 %v1251, %v1297
        %v1303 = vadd.f32 %v1252, %v1299
        %s1304 = sld [smem:[#allocation2 + $0x35]]
        %v1305 = vstv %s1304
        %v1306 = vmul.f32 %v1305, %v952
        %v1307 = vmul.f32 %v1305, %v953
        %v1310 = vrot.slane %v1306, 2
        %v1311 = vrot.slane %v1307, 2
        %v1312 = vsel %vm428, %v1310, %v1311
        %1313 = vrot.lane.b32.xlu0 %v1312, 126
        %v1314 = vpop.permute.xlu0 %1313
        %1315 = vrot.lane.b32.xlu0 %v1311, 126
        %v1316 = vpop.permute.xlu0 %1315
        %v1319 = vadd.f32 %v1268, %v1314
        %v1320 = vadd.f32 %v1269, %v1316
        %s1321 = sld [smem:[#allocation2 + $0x50]]
        %v1322 = vstv %s1321
        %v1323 = vmul.f32 %v1322, %v952
        %v1324 = vmul.f32 %v1322, %v953
        %v1327 = vrot.slane %v1323, 2
        %v1328 = vrot.slane %v1324, 2
        %v1329 = vsel %vm428, %v1327, %v1328
        %1330 = vrot.lane.b32.xlu0 %v1329, 126
        %v1331 = vpop.permute.xlu0 %1330
        %1332 = vrot.lane.b32.xlu0 %v1328, 126
        %v1333 = vpop.permute.xlu0 %1332
        %v1336 = vadd.f32 %v1285, %v1331
        %v1337 = vadd.f32 %v1286, %v1333
        %vm1338 = vcmask 113664
        %1339 = vst.msk [vmem:[%s175] sm:$0xff] %vm1338, %v1302
        %vm1340 = vcmask 111616
        %1341 = vst.msk [vmem:[%s175 + $0x8] sm:$0x3f] %vm1340, %v1303
        %s1342 = scalar_lea.vmem %s175, 16
        %1343 = vst.msk [vmem:[%s1342] sm:$0xff] %vm1338, %v1319
        %1344 = vst.msk [vmem:[%s1342 + $0x8] sm:$0x3f] %vm1340, %v1320
        %s1345 = scalar_lea.vmem %s175, 32
        %1346 = vst.msk [vmem:[%s1345] sm:$0xff] %vm1338, %v1336
        %1347 = vst.msk [vmem:[%s1345 + $0x8] sm:$0x3f] %vm1340, %v1337
        %p1348 = scmp.lt.s32.totalorder %s17, 1
        %s1349 = scalar_select %p1348, %s17, 1
        %s1350 = smul.addr %s1349, 6
        %s1351 = smul.addr %s1350, 8
        %s1352 = scalar_lea.vmem %s2, %s1351
        // Predicated region
        $region37: #{tpu_custom_call.1} parent=27 // pred_check
          %p1353 = pneg %p82
        $region38: #{tpu_custom_call.1} parent=27 // pred_check_branch
          %1355 = sbr.rel (%p1353) target = $region40
        $region39: #{tpu_custom_call.1} parent=27 // pred_region
          _
        $region40: #{tpu_custom_call.1} parent=27 // pred_fallthru
          _
      $region28: #{tpu_custom_call.1} parent=5 // pred_fallthru
        _
      %p1356 = scmp.le.s32.totalorder 2, %s12
      // Predicated region
      $region41: #{tpu_custom_call.1} parent=5 // pred_check
        %p1357 = pneg %p1356
      $region42: #{tpu_custom_call.1} parent=5 // pred_check_branch
        %1359 = sbr.rel (%p1357) target = $region44
      $region43: #{tpu_custom_call.1} parent=5 // pred_region
        %s1360 = ssub.s32 %s12, 2
        // Predicated region
        $region45: #{tpu_custom_call.1} parent=43 // pred_check
          %p1361 = pneg %p88
        $region46: #{tpu_custom_call.1} parent=43 // pred_check_branch
          %1363 = sbr.rel (%p1361) target = $region48
        $region47: #{tpu_custom_call.1} parent=43 // pred_region
          %p1364 = scmp.lt.s32.totalorder %s18, 1
          %s1365 = scalar_select %p1364, %s18, 1
          %s1366 = smul.addr %s1365, 6
          %s1367 = smul.addr %s1366, 8
          %s1368 = scalar_lea.vmem %s2, %s1367
        $region48: #{tpu_custom_call.1} parent=43 // pred_fallthru
          _
      $region44: #{tpu_custom_call.1} parent=5 // pred_fallthru
        _
    $region6: #{tpu_custom_call.1} parent=1 // loop_footer
      %s16 = sadd.s32 1, %s12
    $region7: #{tpu_custom_call.1} parent=1 // loop_footer_branch
      %11 = sbr.rel target = $region3
    $region8: #{tpu_custom_call.1} parent=1 // loop_exit
      _
    %1369 = vsyncpa [#allocation3], 1
    %s1370 = scalar_lea.sflag [#allocation3], 1
    %1371 = vsyncpa %s1370, 1
    %1372 = vsyncpa [#allocation4], 1
    %s1373 = scalar_lea.sflag [#allocation4], 1
    %1374 = vsyncpa %s1373, 1

</llo_original>
